<compile_context>
chip_gen: v7x
topology: tpu7x:2x2x1
jax: 0.10.0
libtpu: 0.0.40
codegen_flags: <defaults>
</compile_context>

<pallas_src>
import functools
import math

import jax
import jax.numpy as jnp
from jax import lax
from jax.experimental import pallas as pl
from jax.experimental.pallas import tpu as pltpu

NEG_SLOPE = 0.01   # nn.LeakyReLU default
BN_EPS = 1e-5      # nn.BatchNorm1d default

# Layer plan mirroring the nn.Sequential:
#   Linear(in,10240)+LReLU,
#   Linear(10240,5120)+BN+LReLU, Linear(5120,2560)+BN+LReLU,
#   Linear(2560,2560)+BN+LReLU,  Linear(2560,5120)+BN+LReLU,
#   Linear(5120,10240)+BN+LReLU, Linear(10240,out)+LReLU
_HIDDEN = [10240, 5120, 2560, 2560, 5120, 10240]
_USE_BN = [False, True, True, True, True, True, False]


@functools.lru_cache(maxsize=None)
def _hw_plan():
    """Generation-aware VMEM budgeting.

    v7x has 64 MiB VMEM per TC (and 2 TCs -> prefer even tile counts on the
    'parallel' axis); v5e/v6e have 128 MiB and a single TC.
    """
    cap = 64 << 20  # conservative fallback if the query is unavailable
    try:
        cap = int(pltpu.get_tpu_info().vmem_capacity_bytes)
    except Exception:
        pass
    weight_block_budget = max(2 << 20, cap // 6)   # int8 weight block, bytes
    vmem_limit = min((cap * 3) // 4, 100 << 20)
    prefer_even = cap <= (64 << 20)                # v7x-class
    return weight_block_budget, vmem_limit, prefer_even


def _pick_tn(K, N):
    """Largest multiple-of-128 divisor of N whose int8 (K, tn) weight block fits
    the generation-aware budget; on v7x-class chips prefer an even tile count
    (megacore balance on the 'parallel' axis)."""
    budget, _, prefer_even = _hw_plan()
    max_tn = max(128, budget // K)                 # int8: 1 byte per element
    cands = [d for d in range(128, N + 1, 128) if N % d == 0 and d <= max_tn]
    if prefer_even:
        even = [d for d in cands if (N // d) % 2 == 0]
        if even:
            return max(even)
    return max(cands)


def _layer_kernel(x_ref, w_ref, e_ref, o_ref, *, use_bn):
    """Fused int8-dequant Linear (+ BatchNorm1d train-mode) + LeakyReLU for one
    (B, tn) output tile.

    x_ref: (B, K) bf16 (resident); w_ref: (K, tn) int8; e_ref packs per-column
    f32 rows: [scale, bias] (no BN) or [scale, gamma, beta] (BN).  Accumulation
    and the whole epilogue run in f32.
    """
    x = x_ref[...]                                       # (B, K) bf16
    w = w_ref[...].astype(jnp.bfloat16)                  # int8 -> bf16 (VPU)
    y = jnp.dot(x, w, preferred_element_type=jnp.float32)
    y = y * e_ref[0:1, :]                                # per-column dequant scale
    if use_bn:
        # Training-mode BatchNorm1d: batch statistics (biased variance).
        # Correct only because the full batch lives inside this block.
        mean = jnp.mean(y, axis=0, keepdims=True)
        var = jnp.mean((y - mean) ** 2, axis=0, keepdims=True)
        y = (y - mean) * lax.rsqrt(var + BN_EPS)
        y = y * e_ref[1:2, :] + e_ref[2:3, :]            # gamma, beta
    else:
        y = y + e_ref[1:2, :]                            # linear bias
    o_ref[...] = jnp.where(y >= 0.0, y, NEG_SLOPE * y).astype(o_ref.dtype)


def linear_bn_lrelu(x, w_blocked, epi, *, use_bn, out_dtype):
    """x: (B, K) bf16; w_blocked: (N//tn, K, tn) int8; epi: (2|3, N) f32.

    Returns (B, N) `out_dtype`.
    """
    B, K = x.shape
    n_tiles, Kw, tn = w_blocked.shape
    assert K == Kw
    N = n_tiles * tn
    n_epi = 3 if use_bn else 2
    assert epi.shape == (n_epi, N)
    assert K % 128 == 0 and tn % 128 == 0, "feature dims must be multiples of 128"
    assert B % 8 == 0, "batch must be a multiple of 8 (sublane alignment)"

    _, vmem_limit, _ = _hw_plan()
    kernel = functools.partial(_layer_kernel, use_bn=use_bn)
    return pl.pallas_call(
        kernel,
        out_shape=jax.ShapeDtypeStruct((B, N), out_dtype),
        grid_spec=pltpu.PrefetchScalarGridSpec(
            num_scalar_prefetch=0,
            grid=(n_tiles,),
            in_specs=[
                # activations, fully resident across all output tiles
                pl.BlockSpec((B, K), lambda j: (0, 0)),
                # int8 weights: one contiguous (K, tn) slab per grid step
                pl.BlockSpec((None, K, tn), lambda j: (j, 0, 0)),
                # packed epilogue (scale [+ bias | gamma, beta]) — single DMA
                pl.BlockSpec((n_epi, tn), lambda j: (0, j)),
            ],
            out_specs=pl.BlockSpec((B, tn), lambda j: (0, j)),
        ),
        compiler_params=pltpu.CompilerParams(
            dimension_semantics=("parallel",),
            vmem_limit_bytes=vmem_limit,
        ),
    )(x, w_blocked, epi)


def init_generator_params(key, input_dim, output_dim):
    dims = [input_dim] + _HIDDEN + [output_dim]
    params = []
    for i in range(len(dims) - 1):
        fan_in, fan_out = dims[i], dims[i + 1]
        use_bn = _USE_BN[i]
        key, kw, kb = jax.random.split(key, 3)
        bound = 1.0 / math.sqrt(fan_in)   # nn.Linear-style uniform init
        w = jax.random.uniform(kw, (fan_in, fan_out), jnp.float32, -bound, bound)
        b = jax.random.uniform(kb, (fan_out,), jnp.float32, -bound, bound)

        # Symmetric per-output-column int8 quantization of the weights.
        absmax = jnp.max(jnp.abs(w), axis=0)
        col_scale = jnp.where(absmax > 0.0, absmax / 127.0, 1.0)
        w_q = jnp.clip(jnp.round(w / col_scale[None, :]), -127, 127).astype(jnp.int8)

        # Pre-block into (N//tn, K, tn): each grid step's weight DMA is one
        # fully contiguous slab.
        tn = _pick_tn(fan_in, fan_out)
        n_tiles = fan_out // tn
        w_blk = w_q.reshape(fan_in, n_tiles, tn).transpose(1, 0, 2)

        if use_bn:
            # Linear bias dropped: train-mode BN subtracts any per-column
            # constant exactly, so it has zero effect on the output.
            gamma = jnp.ones((fan_out,), jnp.float32)   # BN weight
            beta = jnp.zeros((fan_out,), jnp.float32)   # BN bias
            epi = jnp.stack([col_scale, gamma, beta], axis=0)
        else:
            epi = jnp.stack([col_scale, b], axis=0)
        params.append((w_blk, epi, use_bn))
    return params


def generator_forward(params, x, cond):
    a = jnp.concatenate([x, cond], axis=-1)          # torch.cat((x, cond), -1)
    a = a.astype(jnp.bfloat16)                       # activations stream in bf16
    n_layers = len(params)
    for i, (w_blk, epi, use_bn) in enumerate(params):
        out_dtype = jnp.float32 if i == n_layers - 1 else jnp.bfloat16
        a = linear_bn_lrelu(a, w_blk, epi, use_bn=use_bn, out_dtype=out_dtype)
    return a


if __name__ == "__main__":
    key = jax.random.PRNGKey(0)
    kx, kc, kp = jax.random.split(key, 3)

    B = 8                      # small batch (>=2 needed for train-mode BN,
                               #  multiple of 8 for sublane alignment)
    x_dim, cond_dim = 96, 32   # input_dim = 128
    output_dim = 128

    x = jax.random.normal(kx, (B, x_dim), jnp.float32)
    cond = jax.random.normal(kc, (B, cond_dim), jnp.float32)
    params = init_generator_params(kp, x_dim + cond_dim, output_dim)

    out = generator_forward(params, x, cond)
    out = jax.block_until_ready(out)

    assert out.shape == (B, output_dim)
    assert out.dtype == jnp.float32
    assert bool(jnp.all(jnp.isfinite(out)))
    print("KERNEL_OK")
</pallas_src>

<mosaic_0001>
module attributes {stable_mosaic.version = 11 : i64} {
  func.func @_layer_kernel(%arg0: i32, %arg1: memref<8x128xbf16, #tpu.memory_space<vmem>>, %arg2: memref<1x128x5120xi8, #tpu.memory_space<vmem>>, %arg3: memref<2x5120xf32, #tpu.memory_space<vmem>>, %arg4: memref<8x5120xbf16, #tpu.memory_space<vmem>>) attributes {dimension_semantics = [#tpu.dimension_semantics<parallel>], iteration_bounds = array<i64: 2>, scalar_prefetch = 0 : i64, scratch_operands = 0 : i64, tpu.core_type = #tpu.core_type<tc>, window_params = [{pipeline_mode = #tpu.pipeline_mode<synchronous>, transform_indices = @transform_0, window_bounds = array<i64: 8, 128>}, {transform_indices = @transform_1, window_bounds = array<i64: 1, 128, 5120>}, {transform_indices = @transform_2, window_bounds = array<i64: 2, 5120>}, {transform_indices = @transform_3, window_bounds = array<i64: 8, 5120>}]} {
    %c0 = arith.constant 0 : index
    %c0_0 = arith.constant 0 : index
    %0 = vector.load %arg1[%c0, %c0_0] : memref<8x128xbf16, #tpu.memory_space<vmem>>, vector<8x128xbf16>
    %c0_1 = arith.constant 0 : index
    %c0_2 = arith.constant 0 : index
    %c0_3 = arith.constant 0 : index
    %1 = vector.load %arg2[%c0_1, %c0_2, %c0_3] : memref<1x128x5120xi8, #tpu.memory_space<vmem>>, vector<1x128x5120xi8>
    %2 = vector.shape_cast %1 : vector<1x128x5120xi8> to vector<128x5120xi8>
    %3 = arith.sitofp %2 : vector<128x5120xi8> to vector<128x5120xbf16>
    %cst = arith.constant dense<0.000000e+00> : vector<8x5120xf32>
    %4 = tpu.matmul %0, %3, %cst {dimension_numbers = #tpu.dot_dimension_numbers<[1], [0], [0], [1], [0, 0, 1, 1], [], []>} : vector<8x128xbf16>, vector<128x5120xbf16>, vector<8x5120xf32> -> vector<8x5120xf32>
    %c0_4 = arith.constant 0 : index
    %c0_5 = arith.constant 0 : index
    %5 = vector.load %arg3[%c0_4, %c0_5] : memref<2x5120xf32, #tpu.memory_space<vmem>>, vector<1x5120xf32>
    %6 = vector.broadcast %5 : vector<1x5120xf32> to vector<8x5120xf32>
    %7 = arith.mulf %4, %6 : vector<8x5120xf32>
    %c1 = arith.constant 1 : index
    %c0_6 = arith.constant 0 : index
    %8 = vector.load %arg3[%c1, %c0_6] : memref<2x5120xf32, #tpu.memory_space<vmem>>, vector<1x5120xf32>
    %9 = vector.broadcast %8 : vector<1x5120xf32> to vector<8x5120xf32>
    %10 = arith.addf %7, %9 : vector<8x5120xf32>
    %cst_7 = arith.constant 0.000000e+00 : f32
    %11 = vector.broadcast %cst_7 : f32 to vector<8x5120xf32>
    %12 = arith.cmpf oge, %10, %11 : vector<8x5120xf32>
    %cst_8 = arith.constant 0.00999999977 : f32
    %13 = vector.broadcast %cst_8 : f32 to vector<8x5120xf32>
    %14 = arith.mulf %13, %10 : vector<8x5120xf32>
    %15 = arith.select %12, %10, %14 : vector<8x5120xi1>, vector<8x5120xf32>
    %16 = arith.truncf %15 : vector<8x5120xf32> to vector<8x5120xbf16>
    %c0_9 = arith.constant 0 : index
    %c0_10 = arith.constant 0 : index
    %17 = vector.load %arg4[%c0_9, %c0_10] : memref<8x5120xbf16, #tpu.memory_space<vmem>>, vector<8x5120xbf16>
    tpu.vector_store %arg4[%c0_9, %c0_10], %16 {strides = array<i32>} : memref<8x5120xbf16, #tpu.memory_space<vmem>>, vector<8x5120xbf16>,
    return
  }
  func.func @transform_0(%arg0: i32) -> (i32, i32) {
    %c0_i32 = arith.constant 0 : i32
    %c0_i32_0 = arith.constant 0 : i32
    %c0_i32_1 = arith.constant 0 : i32
    return %c0_i32, %c0_i32_0 : i32, i32
  }
  func.func @transform_1(%arg0: i32) -> (i32, i32, i32) {
    %c0_i32 = arith.constant 0 : i32
    %c0_i32_0 = arith.constant 0 : i32
    %c0_i32_1 = arith.constant 0 : i32
    return %arg0, %c0_i32, %c0_i32_0 : i32, i32, i32
  }
  func.func @transform_2(%arg0: i32) -> (i32, i32) {
    %c0_i32 = arith.constant 0 : i32
    %c0_i32_0 = arith.constant 0 : i32
    return %c0_i32, %arg0 : i32, i32
  }
  func.func @transform_3(%arg0: i32) -> (i32, i32) {
    %c0_i32 = arith.constant 0 : i32
    %c0_i32_0 = arith.constant 0 : i32
    return %c0_i32, %arg0 : i32, i32
  }
}

</mosaic_0001>

<llo_original>
// kernel: tpu_custom_call.1
$region0: #{tpu_custom_call.1}
  #allocation0 [shape = 'u32[]', space=smem, size = 0x4, offset = 0x4, fixed_abs, tag = 'smem constant byte address 0x4 - core index']
  #allocation1 [shape = 'u32[144,128]{1,0:T(1,128)}', space=vmem, size = 0x12000, scoped, tag = 'internal scratch']
  %s0 = inlined_call_operand.hbm [shape: bf16[8,128], index: 0, kind: input, shape index: {}]
  %s1 = inlined_call_operand.hbm [shape: s8[2,128,5120], index: 1, kind: input, shape index: {}]
  %s2 = inlined_call_operand.hbm [shape: f32[2,10240], index: 2, kind: input, shape index: {}]
  %s3 = inlined_call_operand.hbm [shape: bf16[8,10240], index: 3, kind: output, shape index: {}]
  %s4 = sld [smem:[#allocation0]]
  $region57: #{tpu_custom_call.1} parent=0
    _
  %s6 = ssub.s32 1, %s4
  %s7 = scalar_select 0, %s6, %s4
  $region1: #{tpu_custom_call.1} parent=0
    #allocation2 [shape = 'u8[2048]{0}', space=vmem, size = 0x800, scoped, tag = 'input window, operand 0, single buffered']
    #allocation3 [shape = 's32[2]{0}', space=sflag, size = 0x8, scoped, tag = 'scoped memory for tpu_custom_call.1']
    #allocation4 [shape = 's32[2]{0}', space=sflag, size = 0x8, scoped, tag = 'scoped memory for tpu_custom_call.1']
    #allocation5 [shape = 'u8[1310720]{0}', space=vmem, size = 0x140000, scoped, tag = 'input window, operand 1']
    #allocation6 [shape = 's32[2]{0}', space=sflag, size = 0x8, scoped, tag = 'scoped memory for tpu_custom_call.1']
    #allocation7 [shape = 'u8[81920]{0}', space=vmem, size = 0x14000, scoped, tag = 'input window, operand 2']
    #allocation8 [shape = 'u8[163840]{0}', space=vmem, size = 0x28000, scoped, tag = 'output window, operand 0']
    %8 = vsyncpa [#allocation3], 0
    %9 = vsyncpa [#allocation6], 0
    %s10 = scalar_lea.sflag [#allocation6], 1
    %11 = vsyncpa %s10, 0
    %12 = vsyncpa [#allocation4], 0
    %s13 = scalar_lea.sflag [#allocation4], 1
    %14 = vsyncpa %s13, 0
    loop: start=0, step=1, limit=4
    $region2: #{tpu_custom_call.1} parent=1 // loop_pre_header
      _
    $region3: #{tpu_custom_call.1} parent=1 // loop_header
      %s16 = sphi 0, %s20
      %p17 = scmp.ge.s32.totalorder %s16, 4
      %s24 = sphi 0, %s24
      %s26 = sphi 0, %s24
      %s27 = sphi 0, %s26
      %s41 = sphi 0, %s27
      %s47 = sphi 0, %s49
      %s50 = sphi 0, %s47
      %s51 = sphi 0, %s50
      %s67 = sphi 0, %s51
      %s73 = sphi 0, %s75
      %s76 = sphi 0, %s73
      %s77 = sphi 0, %s76
      %s93 = sphi 0, %s77
      %s99 = sphi 0, %s101
      %s102 = sphi 0, %s99
      %s103 = sphi 0, %s102
      %s119 = sphi 0, %s103
    $region4: #{tpu_custom_call.1} parent=1 // loop_header_branch
      %19 = sbr.rel (%p17) target = $region8
    $region5: #{tpu_custom_call.1} parent=1 // loop_body
      %s21 = ssub.s32 %s16, 1
      %s22 = ssub.s32 %s16, 2
      %s23 = sadd.s32 %s16, 1
      %s25 = sadd.s32 %s24, 1
      %p28 = scmp.eq.s32.totalorder %s16, 1
      %p29 = scmp.ne.s32.totalorder %s24, %s26
      %p30 = scmp.eq.s32.totalorder %s16, 0
      %p31 = por %p29, %p30
      %p32 = scmp.ne.s32.totalorder %s24, %s26
      %p33 = scmp.eq.s32.totalorder %s21, 1
      %p34 = por %p32, %p33
      %p35 = scmp.ne.s32.totalorder %s26, %s27
      %p36 = scmp.eq.s32.totalorder %s21, 0
      %p37 = por %p35, %p36
      %p38 = scmp.ne.s32.totalorder %s26, %s27
      %p39 = scmp.eq.s32.totalorder %s22, 1
      %p40 = por %p38, %p39
      %p42 = scmp.ne.s32.totalorder %s27, %s41
      %p43 = scmp.eq.s32.totalorder %s22, 0
      %p44 = por %p42, %p43
      %s45 = ssub.s32 %s16, %s23
      %p46 = scmp.eq.s32.totalorder %s45, 0
      %s48 = sadd.s32 %s47, 1
      %s49 = scalar_select %p46, %s47, %s48
      %p52 = pneg %p46
      %p53 = scmp.eq.s32.totalorder %s16, 1
      %p54 = por %p52, %p53
      %p55 = scmp.ne.s32.totalorder %s47, %s50
      %p56 = scmp.eq.s32.totalorder %s16, 0
      %p57 = por %p55, %p56
      %p58 = scmp.ne.s32.totalorder %s47, %s50
      %p59 = scmp.eq.s32.totalorder %s21, 1
      %p60 = por %p58, %p59
      %p61 = scmp.ne.s32.totalorder %s50, %s51
      %p62 = scmp.eq.s32.totalorder %s21, 0
      %p63 = por %p61, %p62
      %p64 = scmp.ne.s32.totalorder %s50, %s51
      %p65 = scmp.eq.s32.totalorder %s22, 1
      %p66 = por %p64, %p65
      %p68 = scmp.ne.s32.totalorder %s51, %s67
      %p69 = scmp.eq.s32.totalorder %s22, 0
      %p70 = por %p68, %p69
      %s71 = ssub.s32 %s16, %s23
      %p72 = scmp.eq.s32.totalorder %s71, 0
      %s74 = sadd.s32 %s73, 1
      %s75 = scalar_select %p72, %s73, %s74
      %p78 = pneg %p72
      %p79 = scmp.eq.s32.totalorder %s16, 1
      %p80 = por %p78, %p79
      %p81 = scmp.ne.s32.totalorder %s73, %s76
      %p82 = scmp.eq.s32.totalorder %s16, 0
      %p83 = por %p81, %p82
      %p84 = scmp.ne.s32.totalorder %s73, %s76
      %p85 = scmp.eq.s32.totalorder %s21, 1
      %p86 = por %p84, %p85
      %p87 = scmp.ne.s32.totalorder %s76, %s77
      %p88 = scmp.eq.s32.totalorder %s21, 0
      %p89 = por %p87, %p88
      %p90 = scmp.ne.s32.totalorder %s76, %s77
      %p91 = scmp.eq.s32.totalorder %s22, 1
      %p92 = por %p90, %p91
      %p94 = scmp.ne.s32.totalorder %s77, %s93
      %p95 = scmp.eq.s32.totalorder %s22, 0
      %p96 = por %p94, %p95
      %s97 = ssub.s32 %s16, %s23
      %p98 = scmp.eq.s32.totalorder %s97, 0
      %s100 = sadd.s32 %s99, 1
      %s101 = scalar_select %p98, %s99, %s100
      %p104 = pneg %p98
      %p105 = scmp.eq.s32.totalorder %s16, 1
      %p106 = por %p104, %p105
      %p107 = scmp.ne.s32.totalorder %s99, %s102
      %p108 = scmp.eq.s32.totalorder %s16, 0
      %p109 = por %p107, %p108
      %p110 = scmp.ne.s32.totalorder %s99, %s102
      %p111 = scmp.eq.s32.totalorder %s21, 1
      %p112 = por %p110, %p111
      %p113 = scmp.ne.s32.totalorder %s102, %s103
      %p114 = scmp.eq.s32.totalorder %s21, 0
      %p115 = por %p113, %p114
      %p116 = scmp.ne.s32.totalorder %s102, %s103
      %p117 = scmp.eq.s32.totalorder %s22, 1
      %p118 = por %p116, %p117
      %p120 = scmp.ne.s32.totalorder %s103, %s119
      %p121 = scmp.eq.s32.totalorder %s22, 0
      %p122 = por %p120, %p121
      %p123 = scmp.le.s32.totalorder 1, %s16
      %p124 = scmp.lt.s32.totalorder %s16, 3
      %p125 = pnand %p123, %p124
      %p126 = pneg %p125
      // Predicated region
      $region9: #{tpu_custom_call.1} parent=5 // pred_check
        _
      $region10: #{tpu_custom_call.1} parent=5 // pred_check_branch
        %128 = sbr.rel (%p125) target = $region12
      $region11: #{tpu_custom_call.1} parent=5 // pred_region
        %s129 = ssub.s32 %s16, 1
        // Predicated region
        $region13: #{tpu_custom_call.1} parent=11 // pred_check
          %p130 = pneg %p37
        $region14: #{tpu_custom_call.1} parent=11 // pred_check_branch
          %132 = sbr.rel (%p130) target = $region16
        $region15: #{tpu_custom_call.1} parent=11 // pred_region
          %s134 = ssub.s32 64, 64
          %135 = vsyncadd [#allocation3], %s134
          %s137 = sshll.u32 [#allocation2], 4
          %s138 = int_to_ptr.vmem [resolvable:$true] %s137
          %140 = dma.hbm_to_vmem [thread:$0]  %s0, 64, %s138, [#allocation3]
        $region16: #{tpu_custom_call.1} parent=11 // pred_fallthru
          _
      $region12: #{tpu_custom_call.1} parent=5 // pred_fallthru
        _
      %p141 = scmp.lt.s32.totalorder %s16, 2
      // Predicated region
      $region17: #{tpu_custom_call.1} parent=5 // pred_check
        %p142 = pneg %p141
      $region18: #{tpu_custom_call.1} parent=5 // pred_check_branch
        %144 = sbr.rel (%p142) target = $region20
      $region19: #{tpu_custom_call.1} parent=5 // pred_region
        // Predicated region
        $region21: #{tpu_custom_call.1} parent=19 // pred_check
          %p145 = pneg %p57
        $region22: #{tpu_custom_call.1} parent=19 // pred_check_branch
          %147 = sbr.rel (%p145) target = $region24
        $region23: #{tpu_custom_call.1} parent=19 // pred_region
          %s148 = sand.u32 %s16, 1
          %s149 = scalar_lea.sflag [#allocation6], %s148
          %s150 = sand.u32 %s47, 1
          %s151 = smul.addr %s150, 1280
          %s152 = scalar_lea.vmem [#allocation5], %s151
          %s154 = ssub.s32 20480, 20480
          %155 = vsyncadd %s149, %s154
          %s156 = smul.addr %s16, 160
          %s157 = smul.addr %s156, 128
          %s158 = scalar_lea.hbm %s1, %s157
          %s159 = sshll.u32 %s152, 4
          %s160 = int_to_ptr.vmem [resolvable:$true] %s159
          %165 = dma.hbm_to_vmem [thread:$0]  %s158, 20480, %s160, %s149, 5120, 5120, 320
        $region24: #{tpu_custom_call.1} parent=19 // pred_fallthru
          _
        // Predicated region
        $region25: #{tpu_custom_call.1} parent=19 // pred_check
          %p166 = pneg %p83
        $region26: #{tpu_custom_call.1} parent=19 // pred_check_branch
          %168 = sbr.rel (%p166) target = $region28
        $region27: #{tpu_custom_call.1} parent=19 // pred_region
          %s169 = sand.u32 %s16, 1
          %s170 = scalar_lea.sflag [#allocation6], %s169
          %s171 = sand.u32 %s73, 1
          %s172 = smul.addr %s171, 80
          %s173 = scalar_lea.vmem [#allocation7], %s172
          %s174 = smul.u32 40, %s16
          %s176 = ssub.s32 1280, 1280
          %177 = vsyncadd %s170, %s176
          %s178 = smul.addr %s174, 32
          %s179 = scalar_lea.hbm %s2, %s178
          %s181 = sshll.u32 %s173, 4
          %s182 = int_to_ptr.vmem [resolvable:$true] %s181
          %184 = dma.hbm_to_vmem [thread:$0]  %s179, 1280, %s182, %s170
        $region28: #{tpu_custom_call.1} parent=19 // pred_fallthru
          _
      $region20: #{tpu_custom_call.1} parent=5 // pred_fallthru
        _
      %p185 = scmp.le.s32.totalorder 1, %s16
      %p186 = scmp.lt.s32.totalorder %s16, 3
      %p187 = pnand %p185, %p186
      %p188 = pneg %p187
      // Predicated region
      $region29: #{tpu_custom_call.1} parent=5 // pred_check
        _
      $region30: #{tpu_custom_call.1} parent=5 // pred_check_branch
        %190 = sbr.rel (%p187) target = $region32
      $region31: #{tpu_custom_call.1} parent=5 // pred_region
        %s191 = ssub.s32 %s16, 1
        // Predicated region
        $region33: #{tpu_custom_call.1} parent=31 // pred_check
          %p192 = pneg %p37
        $region34: #{tpu_custom_call.1} parent=31 // pred_check_branch
          %194 = sbr.rel (%p192) target = $region36
        $region35: #{tpu_custom_call.1} parent=31 // pred_region
          %195 = dma.done [#allocation3], 64
        $region36: #{tpu_custom_call.1} parent=31 // pred_fallthru
          _
        %s196 = sand.u32 %s21, 1
        %s197 = scalar_lea.sflag [#allocation6], %s196
        %s198 = sand.u32 %s50, 1
        %s199 = smul.addr %s198, 1280
        %s200 = scalar_lea.vmem [#allocation5], %s199
        // Predicated region
        $region37: #{tpu_custom_call.1} parent=31 // pred_check
          %p201 = pneg %p63
        $region38: #{tpu_custom_call.1} parent=31 // pred_check_branch
          %203 = sbr.rel (%p201) target = $region40
        $region39: #{tpu_custom_call.1} parent=31 // pred_region
          %204 = dma.done %s197, 20480
        $region40: #{tpu_custom_call.1} parent=31 // pred_fallthru
          _
        %s205 = sand.u32 %s21, 1
        %s206 = scalar_lea.sflag [#allocation6], %s205
        %s207 = sand.u32 %s76, 1
        %s208 = smul.addr %s207, 80
        %s209 = scalar_lea.vmem [#allocation7], %s208
        // Predicated region
        $region41: #{tpu_custom_call.1} parent=31 // pred_check
          %p210 = pneg %p89
        $region42: #{tpu_custom_call.1} parent=31 // pred_check_branch
          %212 = sbr.rel (%p210) target = $region44
        $region43: #{tpu_custom_call.1} parent=31 // pred_region
          %213 = dma.done %s206, 1280
        $region44: #{tpu_custom_call.1} parent=31 // pred_fallthru
          _
        %p214 = pneg %p37
        %p215 = pneg %p34
        %s216 = sand.u32 %s21, 1
        %s217 = scalar_lea.sflag [#allocation6], %s216
        %s218 = sand.u32 %s50, 1
        %s219 = smul.addr %s218, 1280
        %s220 = scalar_lea.vmem [#allocation5], %s219
        %p221 = pneg %p63
        %p222 = pneg %p60
        %s223 = sand.u32 %s21, 1
        %s224 = scalar_lea.sflag [#allocation6], %s223
        %s225 = sand.u32 %s76, 1
        %s226 = smul.addr %s225, 80
        %s227 = scalar_lea.vmem [#allocation7], %s226
        %p228 = pneg %p89
        %p229 = pneg %p86
        %p230 = pneg %p115
        %p231 = pneg %p112
        %s232 = sand.u32 %s102, 1
        %s233 = scalar_lea.sflag [#allocation4], %s232
        %s234 = sand.u32 %s102, 1
        %s235 = smul.addr %s234, 160
        %s236 = scalar_lea.vmem [#allocation8], %s235
        %s237 = smul.u32 40, %s21
        %s238 = smul.u32 40, %s21
        %v240 = vld [vmem:[#allocation2] sm:$0xf]
        %v241 = vld [vmem:[%s200] sm:$0xff]
        %v242 = vld [vmem:[%s200 + $0x8] sm:$0xff]
        %v243 = vld [vmem:[%s200 + $0x10] sm:$0xff]
        %v244 = vld [vmem:[%s200 + $0x18] sm:$0xff]
        %v245 = vld [vmem:[%s200 + $0x20] sm:$0xff]
        %v246 = vld [vmem:[%s200 + $0x28] sm:$0xff]
        %v247 = vld [vmem:[%s200 + $0x30] sm:$0xff]
        %v248 = vld [vmem:[%s200 + $0x38] sm:$0xff]
        %v249 = vld [vmem:[%s200 + $0x40] sm:$0xff]
        %v250 = vld [vmem:[%s200 + $0x48] sm:$0xff]
        %v251 = vld [vmem:[%s200 + $0x50] sm:$0xff]
        %v252 = vld [vmem:[%s200 + $0x58] sm:$0xff]
        %v253 = vld [vmem:[%s200 + $0x60] sm:$0xff]
        %v254 = vld [vmem:[%s200 + $0x68] sm:$0xff]
        %v255 = vld [vmem:[%s200 + $0x70] sm:$0xff]
        %v256 = vld [vmem:[%s200 + $0x78] sm:$0xff]
        %v257 = vld [vmem:[%s200 + $0x80] sm:$0xff]
        %v258 = vld [vmem:[%s200 + $0x88] sm:$0xff]
        %v259 = vld [vmem:[%s200 + $0x90] sm:$0xff]
        %v260 = vld [vmem:[%s200 + $0x98] sm:$0xff]
        %v261 = vld [vmem:[%s200 + $0xa0] sm:$0xff]
        %v262 = vld [vmem:[%s200 + $0xa8] sm:$0xff]
        %v263 = vld [vmem:[%s200 + $0xb0] sm:$0xff]
        %v264 = vld [vmem:[%s200 + $0xb8] sm:$0xff]
        %v265 = vld [vmem:[%s200 + $0xc0] sm:$0xff]
        %v266 = vld [vmem:[%s200 + $0xc8] sm:$0xff]
        %v267 = vld [vmem:[%s200 + $0xd0] sm:$0xff]
        %v268 = vld [vmem:[%s200 + $0xd8] sm:$0xff]
        %v269 = vld [vmem:[%s200 + $0xe0] sm:$0xff]
        %v270 = vld [vmem:[%s200 + $0xe8] sm:$0xff]
        %v271 = vld [vmem:[%s200 + $0xf0] sm:$0xff]
        %v272 = vld [vmem:[%s200 + $0xf8] sm:$0xff]
        %v273 = vld [vmem:[%s200 + $0x100] sm:$0xff]
        %v274 = vld [vmem:[%s200 + $0x108] sm:$0xff]
        %v275 = vld [vmem:[%s200 + $0x110] sm:$0xff]
        %v276 = vld [vmem:[%s200 + $0x118] sm:$0xff]
        %v277 = vld [vmem:[%s200 + $0x120] sm:$0xff]
        %v278 = vld [vmem:[%s200 + $0x128] sm:$0xff]
        %v279 = vld [vmem:[%s200 + $0x130] sm:$0xff]
        %v280 = vld [vmem:[%s200 + $0x138] sm:$0xff]
        %v281 = vld [vmem:[%s200 + $0x140] sm:$0xff]
        %v282 = vld [vmem:[%s200 + $0x148] sm:$0xff]
        %v283 = vld [vmem:[%s200 + $0x150] sm:$0xff]
        %v284 = vld [vmem:[%s200 + $0x158] sm:$0xff]
        %v285 = vld [vmem:[%s200 + $0x160] sm:$0xff]
        %v286 = vld [vmem:[%s200 + $0x168] sm:$0xff]
        %v287 = vld [vmem:[%s200 + $0x170] sm:$0xff]
        %v288 = vld [vmem:[%s200 + $0x178] sm:$0xff]
        %v289 = vld [vmem:[%s200 + $0x180] sm:$0xff]
        %v290 = vld [vmem:[%s200 + $0x188] sm:$0xff]
        %v291 = vld [vmem:[%s200 + $0x190] sm:$0xff]
        %v292 = vld [vmem:[%s200 + $0x198] sm:$0xff]
        %v293 = vld [vmem:[%s200 + $0x1a0] sm:$0xff]
        %v294 = vld [vmem:[%s200 + $0x1a8] sm:$0xff]
        %v295 = vld [vmem:[%s200 + $0x1b0] sm:$0xff]
        %v296 = vld [vmem:[%s200 + $0x1b8] sm:$0xff]
        %v297 = vld [vmem:[%s200 + $0x1c0] sm:$0xff]
        %v298 = vld [vmem:[%s200 + $0x1c8] sm:$0xff]
        %v299 = vld [vmem:[%s200 + $0x1d0] sm:$0xff]
        %v300 = vld [vmem:[%s200 + $0x1d8] sm:$0xff]
        %v301 = vld [vmem:[%s200 + $0x1e0] sm:$0xff]
        %v302 = vld [vmem:[%s200 + $0x1e8] sm:$0xff]
        %v303 = vld [vmem:[%s200 + $0x1f0] sm:$0xff]
        %v304 = vld [vmem:[%s200 + $0x1f8] sm:$0xff]
        %v305 = vld [vmem:[%s200 + $0x200] sm:$0xff]
        %v306 = vld [vmem:[%s200 + $0x208] sm:$0xff]
        %v307 = vld [vmem:[%s200 + $0x210] sm:$0xff]
        %v308 = vld [vmem:[%s200 + $0x218] sm:$0xff]
        %v309 = vld [vmem:[%s200 + $0x220] sm:$0xff]
        %v310 = vld [vmem:[%s200 + $0x228] sm:$0xff]
        %v311 = vld [vmem:[%s200 + $0x230] sm:$0xff]
        %v312 = vld [vmem:[%s200 + $0x238] sm:$0xff]
        %v313 = vld [vmem:[%s200 + $0x240] sm:$0xff]
        %v314 = vld [vmem:[%s200 + $0x248] sm:$0xff]
        %v315 = vld [vmem:[%s200 + $0x250] sm:$0xff]
        %v316 = vld [vmem:[%s200 + $0x258] sm:$0xff]
        %v317 = vld [vmem:[%s200 + $0x260] sm:$0xff]
        %v318 = vld [vmem:[%s200 + $0x268] sm:$0xff]
        %v319 = vld [vmem:[%s200 + $0x270] sm:$0xff]
        %v320 = vld [vmem:[%s200 + $0x278] sm:$0xff]
        %v321 = vld [vmem:[%s200 + $0x280] sm:$0xff]
        %v322 = vld [vmem:[%s200 + $0x288] sm:$0xff]
        %v323 = vld [vmem:[%s200 + $0x290] sm:$0xff]
        %v324 = vld [vmem:[%s200 + $0x298] sm:$0xff]
        %v325 = vld [vmem:[%s200 + $0x2a0] sm:$0xff]
        %v326 = vld [vmem:[%s200 + $0x2a8] sm:$0xff]
        %v327 = vld [vmem:[%s200 + $0x2b0] sm:$0xff]
        %v328 = vld [vmem:[%s200 + $0x2b8] sm:$0xff]
        %v329 = vld [vmem:[%s200 + $0x2c0] sm:$0xff]
        %v330 = vld [vmem:[%s200 + $0x2c8] sm:$0xff]
        %v331 = vld [vmem:[%s200 + $0x2d0] sm:$0xff]
        %v332 = vld [vmem:[%s200 + $0x2d8] sm:$0xff]
        %v333 = vld [vmem:[%s200 + $0x2e0] sm:$0xff]
        %v334 = vld [vmem:[%s200 + $0x2e8] sm:$0xff]
        %v335 = vld [vmem:[%s200 + $0x2f0] sm:$0xff]
        %v336 = vld [vmem:[%s200 + $0x2f8] sm:$0xff]
        %v337 = vld [vmem:[%s200 + $0x300] sm:$0xff]
        %v338 = vld [vmem:[%s200 + $0x308] sm:$0xff]
        %v339 = vld [vmem:[%s200 + $0x310] sm:$0xff]
        %v340 = vld [vmem:[%s200 + $0x318] sm:$0xff]
        %v341 = vld [vmem:[%s200 + $0x320] sm:$0xff]
        %v342 = vld [vmem:[%s200 + $0x328] sm:$0xff]
        %v343 = vld [vmem:[%s200 + $0x330] sm:$0xff]
        %v344 = vld [vmem:[%s200 + $0x338] sm:$0xff]
        %v345 = vld [vmem:[%s200 + $0x340] sm:$0xff]
        %v346 = vld [vmem:[%s200 + $0x348] sm:$0xff]
        %v347 = vld [vmem:[%s200 + $0x350] sm:$0xff]
        %v348 = vld [vmem:[%s200 + $0x358] sm:$0xff]
        %v349 = vld [vmem:[%s200 + $0x360] sm:$0xff]
        %v350 = vld [vmem:[%s200 + $0x368] sm:$0xff]
        %v351 = vld [vmem:[%s200 + $0x370] sm:$0xff]
        %v352 = vld [vmem:[%s200 + $0x378] sm:$0xff]
        %v353 = vld [vmem:[%s200 + $0x380] sm:$0xff]
        %v354 = vld [vmem:[%s200 + $0x388] sm:$0xff]
        %v355 = vld [vmem:[%s200 + $0x390] sm:$0xff]
        %v356 = vld [vmem:[%s200 + $0x398] sm:$0xff]
        %v357 = vld [vmem:[%s200 + $0x3a0] sm:$0xff]
        %v358 = vld [vmem:[%s200 + $0x3a8] sm:$0xff]
        %v359 = vld [vmem:[%s200 + $0x3b0] sm:$0xff]
        %v360 = vld [vmem:[%s200 + $0x3b8] sm:$0xff]
        %v361 = vld [vmem:[%s200 + $0x3c0] sm:$0xff]
        %v362 = vld [vmem:[%s200 + $0x3c8] sm:$0xff]
        %v363 = vld [vmem:[%s200 + $0x3d0] sm:$0xff]
        %v364 = vld [vmem:[%s200 + $0x3d8] sm:$0xff]
        %v365 = vld [vmem:[%s200 + $0x3e0] sm:$0xff]
        %v366 = vld [vmem:[%s200 + $0x3e8] sm:$0xff]
        %v367 = vld [vmem:[%s200 + $0x3f0] sm:$0xff]
        %v368 = vld [vmem:[%s200 + $0x3f8] sm:$0xff]
        %v369 = vld [vmem:[%s200 + $0x400] sm:$0xff]
        %v370 = vld [vmem:[%s200 + $0x408] sm:$0xff]
        %v371 = vld [vmem:[%s200 + $0x410] sm:$0xff]
        %v372 = vld [vmem:[%s200 + $0x418] sm:$0xff]
        %v373 = vld [vmem:[%s200 + $0x420] sm:$0xff]
        %v374 = vld [vmem:[%s200 + $0x428] sm:$0xff]
        %v375 = vld [vmem:[%s200 + $0x430] sm:$0xff]
        %v376 = vld [vmem:[%s200 + $0x438] sm:$0xff]
        %v377 = vld [vmem:[%s200 + $0x440] sm:$0xff]
        %v378 = vld [vmem:[%s200 + $0x448] sm:$0xff]
        %v379 = vld [vmem:[%s200 + $0x450] sm:$0xff]
        %v380 = vld [vmem:[%s200 + $0x458] sm:$0xff]
        %v381 = vld [vmem:[%s200 + $0x460] sm:$0xff]
        %v382 = vld [vmem:[%s200 + $0x468] sm:$0xff]
        %v383 = vld [vmem:[%s200 + $0x470] sm:$0xff]
        %v384 = vld [vmem:[%s200 + $0x478] sm:$0xff]
        %v385 = vld [vmem:[%s200 + $0x480] sm:$0xff]
        %v386 = vld [vmem:[%s200 + $0x488] sm:$0xff]
        %v387 = vld [vmem:[%s200 + $0x490] sm:$0xff]
        %v388 = vld [vmem:[%s200 + $0x498] sm:$0xff]
        %v389 = vld [vmem:[%s200 + $0x4a0] sm:$0xff]
        %v390 = vld [vmem:[%s200 + $0x4a8] sm:$0xff]
        %v391 = vld [vmem:[%s200 + $0x4b0] sm:$0xff]
        %v392 = vld [vmem:[%s200 + $0x4b8] sm:$0xff]
        %v393 = vld [vmem:[%s200 + $0x4c0] sm:$0xff]
        %v394 = vld [vmem:[%s200 + $0x4c8] sm:$0xff]
        %v395 = vld [vmem:[%s200 + $0x4d0] sm:$0xff]
        %v396 = vld [vmem:[%s200 + $0x4d8] sm:$0xff]
        %v397 = vld [vmem:[%s200 + $0x4e0] sm:$0xff]
        %v398 = vld [vmem:[%s200 + $0x4e8] sm:$0xff]
        %v399 = vld [vmem:[%s200 + $0x4f0] sm:$0xff]
        %v400 = vld [vmem:[%s200 + $0x4f8] sm:$0xff]
        %v401 = vunpack.c.l.s8.bf16 %v241
        %v402 = vunpack.c.l.s8.bf16 %v242
        %v403 = vunpack.c.l.s8.bf16 %v243
        %v404 = vunpack.c.l.s8.bf16 %v244
        %v405 = vunpack.c.l.s8.bf16 %v245
        %v406 = vunpack.c.l.s8.bf16 %v246
        %v407 = vunpack.c.l.s8.bf16 %v247
        %v408 = vunpack.c.l.s8.bf16 %v248
        %v409 = vunpack.c.l.s8.bf16 %v249
        %v410 = vunpack.c.l.s8.bf16 %v250
        %v411 = vunpack.c.l.s8.bf16 %v251
        %v412 = vunpack.c.l.s8.bf16 %v252
        %v413 = vunpack.c.l.s8.bf16 %v253
        %v414 = vunpack.c.l.s8.bf16 %v254
        %v415 = vunpack.c.l.s8.bf16 %v255
        %v416 = vunpack.c.l.s8.bf16 %v256
        %v417 = vunpack.c.l.s8.bf16 %v257
        %v418 = vunpack.c.l.s8.bf16 %v258
        %v419 = vunpack.c.l.s8.bf16 %v259
        %v420 = vunpack.c.l.s8.bf16 %v260
        %v421 = vunpack.c.l.s8.bf16 %v261
        %v422 = vunpack.c.l.s8.bf16 %v262
        %v423 = vunpack.c.l.s8.bf16 %v263
        %v424 = vunpack.c.l.s8.bf16 %v264
        %v425 = vunpack.c.l.s8.bf16 %v265
        %v426 = vunpack.c.l.s8.bf16 %v266
        %v427 = vunpack.c.l.s8.bf16 %v267
        %v428 = vunpack.c.l.s8.bf16 %v268
        %v429 = vunpack.c.l.s8.bf16 %v269
        %v430 = vunpack.c.l.s8.bf16 %v270
        %v431 = vunpack.c.l.s8.bf16 %v271
        %v432 = vunpack.c.l.s8.bf16 %v272
        %v433 = vunpack.c.l.s8.bf16 %v273
        %v434 = vunpack.c.l.s8.bf16 %v274
        %v435 = vunpack.c.l.s8.bf16 %v275
        %v436 = vunpack.c.l.s8.bf16 %v276
        %v437 = vunpack.c.l.s8.bf16 %v277
        %v438 = vunpack.c.l.s8.bf16 %v278
        %v439 = vunpack.c.l.s8.bf16 %v279
        %v440 = vunpack.c.l.s8.bf16 %v280
        %v441 = vunpack.c.h.s8.bf16 %v241
        %v442 = vunpack.c.h.s8.bf16 %v242
        %v443 = vunpack.c.h.s8.bf16 %v243
        %v444 = vunpack.c.h.s8.bf16 %v244
        %v445 = vunpack.c.h.s8.bf16 %v245
        %v446 = vunpack.c.h.s8.bf16 %v246
        %v447 = vunpack.c.h.s8.bf16 %v247
        %v448 = vunpack.c.h.s8.bf16 %v248
        %v449 = vunpack.c.h.s8.bf16 %v249
        %v450 = vunpack.c.h.s8.bf16 %v250
        %v451 = vunpack.c.h.s8.bf16 %v251
        %v452 = vunpack.c.h.s8.bf16 %v252
        %v453 = vunpack.c.h.s8.bf16 %v253
        %v454 = vunpack.c.h.s8.bf16 %v254
        %v455 = vunpack.c.h.s8.bf16 %v255
        %v456 = vunpack.c.h.s8.bf16 %v256
        %v457 = vunpack.c.h.s8.bf16 %v257
        %v458 = vunpack.c.h.s8.bf16 %v258
        %v459 = vunpack.c.h.s8.bf16 %v259
        %v460 = vunpack.c.h.s8.bf16 %v260
        %v461 = vunpack.c.h.s8.bf16 %v261
        %v462 = vunpack.c.h.s8.bf16 %v262
        %v463 = vunpack.c.h.s8.bf16 %v263
        %v464 = vunpack.c.h.s8.bf16 %v264
        %v465 = vunpack.c.h.s8.bf16 %v265
        %v466 = vunpack.c.h.s8.bf16 %v266
        %v467 = vunpack.c.h.s8.bf16 %v267
        %v468 = vunpack.c.h.s8.bf16 %v268
        %v469 = vunpack.c.h.s8.bf16 %v269
        %v470 = vunpack.c.h.s8.bf16 %v270
        %v471 = vunpack.c.h.s8.bf16 %v271
        %v472 = vunpack.c.h.s8.bf16 %v272
        %v473 = vunpack.c.h.s8.bf16 %v273
        %v474 = vunpack.c.h.s8.bf16 %v274
        %v475 = vunpack.c.h.s8.bf16 %v275
        %v476 = vunpack.c.h.s8.bf16 %v276
        %v477 = vunpack.c.h.s8.bf16 %v277
        %v478 = vunpack.c.h.s8.bf16 %v278
        %v479 = vunpack.c.h.s8.bf16 %v279
        %v480 = vunpack.c.h.s8.bf16 %v280
        %v481 = vunpack.c.l.s8.bf16 %v281
        %v482 = vunpack.c.l.s8.bf16 %v282
        %v483 = vunpack.c.l.s8.bf16 %v283
        %v484 = vunpack.c.l.s8.bf16 %v284
        %v485 = vunpack.c.l.s8.bf16 %v285
        %v486 = vunpack.c.l.s8.bf16 %v286
        %v487 = vunpack.c.l.s8.bf16 %v287
        %v488 = vunpack.c.l.s8.bf16 %v288
        %v489 = vunpack.c.l.s8.bf16 %v289
        %v490 = vunpack.c.l.s8.bf16 %v290
        %v491 = vunpack.c.l.s8.bf16 %v291
        %v492 = vunpack.c.l.s8.bf16 %v292
        %v493 = vunpack.c.l.s8.bf16 %v293
        %v494 = vunpack.c.l.s8.bf16 %v294
        %v495 = vunpack.c.l.s8.bf16 %v295
        %v496 = vunpack.c.l.s8.bf16 %v296
        %v497 = vunpack.c.l.s8.bf16 %v297
        %v498 = vunpack.c.l.s8.bf16 %v298
        %v499 = vunpack.c.l.s8.bf16 %v299
        %v500 = vunpack.c.l.s8.bf16 %v300
        %v501 = vunpack.c.l.s8.bf16 %v301
        %v502 = vunpack.c.l.s8.bf16 %v302
        %v503 = vunpack.c.l.s8.bf16 %v303
        %v504 = vunpack.c.l.s8.bf16 %v304
        %v505 = vunpack.c.l.s8.bf16 %v305
        %v506 = vunpack.c.l.s8.bf16 %v306
        %v507 = vunpack.c.l.s8.bf16 %v307
        %v508 = vunpack.c.l.s8.bf16 %v308
        %v509 = vunpack.c.l.s8.bf16 %v309
        %v510 = vunpack.c.l.s8.bf16 %v310
        %v511 = vunpack.c.l.s8.bf16 %v311
        %v512 = vunpack.c.l.s8.bf16 %v312
        %v513 = vunpack.c.l.s8.bf16 %v313
        %v514 = vunpack.c.l.s8.bf16 %v314
        %v515 = vunpack.c.l.s8.bf16 %v315
        %v516 = vunpack.c.l.s8.bf16 %v316
        %v517 = vunpack.c.l.s8.bf16 %v317
        %v518 = vunpack.c.l.s8.bf16 %v318
        %v519 = vunpack.c.l.s8.bf16 %v319
        %v520 = vunpack.c.l.s8.bf16 %v320
        %v521 = vunpack.c.h.s8.bf16 %v281
        %v522 = vunpack.c.h.s8.bf16 %v282
        %v523 = vunpack.c.h.s8.bf16 %v283
        %v524 = vunpack.c.h.s8.bf16 %v284
        %v525 = vunpack.c.h.s8.bf16 %v285
        %v526 = vunpack.c.h.s8.bf16 %v286
        %v527 = vunpack.c.h.s8.bf16 %v287
        %v528 = vunpack.c.h.s8.bf16 %v288
        %v529 = vunpack.c.h.s8.bf16 %v289
        %v530 = vunpack.c.h.s8.bf16 %v290
        %v531 = vunpack.c.h.s8.bf16 %v291
        %v532 = vunpack.c.h.s8.bf16 %v292
        %v533 = vunpack.c.h.s8.bf16 %v293
        %v534 = vunpack.c.h.s8.bf16 %v294
        %v535 = vunpack.c.h.s8.bf16 %v295
        %v536 = vunpack.c.h.s8.bf16 %v296
        %v537 = vunpack.c.h.s8.bf16 %v297
        %v538 = vunpack.c.h.s8.bf16 %v298
        %v539 = vunpack.c.h.s8.bf16 %v299
        %v540 = vunpack.c.h.s8.bf16 %v300
        %v541 = vunpack.c.h.s8.bf16 %v301
        %v542 = vunpack.c.h.s8.bf16 %v302
        %v543 = vunpack.c.h.s8.bf16 %v303
        %v544 = vunpack.c.h.s8.bf16 %v304
        %v545 = vunpack.c.h.s8.bf16 %v305
        %v546 = vunpack.c.h.s8.bf16 %v306
        %v547 = vunpack.c.h.s8.bf16 %v307
        %v548 = vunpack.c.h.s8.bf16 %v308
        %v549 = vunpack.c.h.s8.bf16 %v309
        %v550 = vunpack.c.h.s8.bf16 %v310
        %v551 = vunpack.c.h.s8.bf16 %v311
        %v552 = vunpack.c.h.s8.bf16 %v312
        %v553 = vunpack.c.h.s8.bf16 %v313
        %v554 = vunpack.c.h.s8.bf16 %v314
        %v555 = vunpack.c.h.s8.bf16 %v315
        %v556 = vunpack.c.h.s8.bf16 %v316
        %v557 = vunpack.c.h.s8.bf16 %v317
        %v558 = vunpack.c.h.s8.bf16 %v318
        %v559 = vunpack.c.h.s8.bf16 %v319
        %v560 = vunpack.c.h.s8.bf16 %v320
        %v561 = vunpack.c.l.s8.bf16 %v321
        %v562 = vunpack.c.l.s8.bf16 %v322
        %v563 = vunpack.c.l.s8.bf16 %v323
        %v564 = vunpack.c.l.s8.bf16 %v324
        %v565 = vunpack.c.l.s8.bf16 %v325
        %v566 = vunpack.c.l.s8.bf16 %v326
        %v567 = vunpack.c.l.s8.bf16 %v327
        %v568 = vunpack.c.l.s8.bf16 %v328
        %v569 = vunpack.c.l.s8.bf16 %v329
        %v570 = vunpack.c.l.s8.bf16 %v330
        %v571 = vunpack.c.l.s8.bf16 %v331
        %v572 = vunpack.c.l.s8.bf16 %v332
        %v573 = vunpack.c.l.s8.bf16 %v333
        %v574 = vunpack.c.l.s8.bf16 %v334
        %v575 = vunpack.c.l.s8.bf16 %v335
        %v576 = vunpack.c.l.s8.bf16 %v336
        %v577 = vunpack.c.l.s8.bf16 %v337
        %v578 = vunpack.c.l.s8.bf16 %v338
        %v579 = vunpack.c.l.s8.bf16 %v339
        %v580 = vunpack.c.l.s8.bf16 %v340
        %v581 = vunpack.c.l.s8.bf16 %v341
        %v582 = vunpack.c.l.s8.bf16 %v342
        %v583 = vunpack.c.l.s8.bf16 %v343
        %v584 = vunpack.c.l.s8.bf16 %v344
        %v585 = vunpack.c.l.s8.bf16 %v345
        %v586 = vunpack.c.l.s8.bf16 %v346
        %v587 = vunpack.c.l.s8.bf16 %v347
        %v588 = vunpack.c.l.s8.bf16 %v348
        %v589 = vunpack.c.l.s8.bf16 %v349
        %v590 = vunpack.c.l.s8.bf16 %v350
        %v591 = vunpack.c.l.s8.bf16 %v351
        %v592 = vunpack.c.l.s8.bf16 %v352
        %v593 = vunpack.c.l.s8.bf16 %v353
        %v594 = vunpack.c.l.s8.bf16 %v354
        %v595 = vunpack.c.l.s8.bf16 %v355
        %v596 = vunpack.c.l.s8.bf16 %v356
        %v597 = vunpack.c.l.s8.bf16 %v357
        %v598 = vunpack.c.l.s8.bf16 %v358
        %v599 = vunpack.c.l.s8.bf16 %v359
        %v600 = vunpack.c.l.s8.bf16 %v360
        %v601 = vunpack.c.h.s8.bf16 %v321
        %v602 = vunpack.c.h.s8.bf16 %v322
        %v603 = vunpack.c.h.s8.bf16 %v323
        %v604 = vunpack.c.h.s8.bf16 %v324
        %v605 = vunpack.c.h.s8.bf16 %v325
        %v606 = vunpack.c.h.s8.bf16 %v326
        %v607 = vunpack.c.h.s8.bf16 %v327
        %v608 = vunpack.c.h.s8.bf16 %v328
        %v609 = vunpack.c.h.s8.bf16 %v329
        %v610 = vunpack.c.h.s8.bf16 %v330
        %v611 = vunpack.c.h.s8.bf16 %v331
        %v612 = vunpack.c.h.s8.bf16 %v332
        %v613 = vunpack.c.h.s8.bf16 %v333
        %v614 = vunpack.c.h.s8.bf16 %v334
        %v615 = vunpack.c.h.s8.bf16 %v335
        %v616 = vunpack.c.h.s8.bf16 %v336
        %v617 = vunpack.c.h.s8.bf16 %v337
        %v618 = vunpack.c.h.s8.bf16 %v338
        %v619 = vunpack.c.h.s8.bf16 %v339
        %v620 = vunpack.c.h.s8.bf16 %v340
        %v621 = vunpack.c.h.s8.bf16 %v341
        %v622 = vunpack.c.h.s8.bf16 %v342
        %v623 = vunpack.c.h.s8.bf16 %v343
        %v624 = vunpack.c.h.s8.bf16 %v344
        %v625 = vunpack.c.h.s8.bf16 %v345
        %v626 = vunpack.c.h.s8.bf16 %v346
        %v627 = vunpack.c.h.s8.bf16 %v347
        %v628 = vunpack.c.h.s8.bf16 %v348
        %v629 = vunpack.c.h.s8.bf16 %v349
        %v630 = vunpack.c.h.s8.bf16 %v350
        %v631 = vunpack.c.h.s8.bf16 %v351
        %v632 = vunpack.c.h.s8.bf16 %v352
        %v633 = vunpack.c.h.s8.bf16 %v353
        %v634 = vunpack.c.h.s8.bf16 %v354
        %v635 = vunpack.c.h.s8.bf16 %v355
        %v636 = vunpack.c.h.s8.bf16 %v356
        %v637 = vunpack.c.h.s8.bf16 %v357
        %v638 = vunpack.c.h.s8.bf16 %v358
        %v639 = vunpack.c.h.s8.bf16 %v359
        %v640 = vunpack.c.h.s8.bf16 %v360
        %v641 = vunpack.c.l.s8.bf16 %v361
        %v642 = vunpack.c.l.s8.bf16 %v362
        %v643 = vunpack.c.l.s8.bf16 %v363
        %v644 = vunpack.c.l.s8.bf16 %v364
        %v645 = vunpack.c.l.s8.bf16 %v365
        %v646 = vunpack.c.l.s8.bf16 %v366
        %v647 = vunpack.c.l.s8.bf16 %v367
        %v648 = vunpack.c.l.s8.bf16 %v368
        %v649 = vunpack.c.l.s8.bf16 %v369
        %v650 = vunpack.c.l.s8.bf16 %v370
        %v651 = vunpack.c.l.s8.bf16 %v371
        %v652 = vunpack.c.l.s8.bf16 %v372
        %v653 = vunpack.c.l.s8.bf16 %v373
        %v654 = vunpack.c.l.s8.bf16 %v374
        %v655 = vunpack.c.l.s8.bf16 %v375
        %v656 = vunpack.c.l.s8.bf16 %v376
        %v657 = vunpack.c.l.s8.bf16 %v377
        %v658 = vunpack.c.l.s8.bf16 %v378
        %v659 = vunpack.c.l.s8.bf16 %v379
        %v660 = vunpack.c.l.s8.bf16 %v380
        %v661 = vunpack.c.l.s8.bf16 %v381
        %v662 = vunpack.c.l.s8.bf16 %v382
        %v663 = vunpack.c.l.s8.bf16 %v383
        %v664 = vunpack.c.l.s8.bf16 %v384
        %v665 = vunpack.c.l.s8.bf16 %v385
        %v666 = vunpack.c.l.s8.bf16 %v386
        %v667 = vunpack.c.l.s8.bf16 %v387
        %v668 = vunpack.c.l.s8.bf16 %v388
        %v669 = vunpack.c.l.s8.bf16 %v389
        %v670 = vunpack.c.l.s8.bf16 %v390
        %v671 = vunpack.c.l.s8.bf16 %v391
        %v672 = vunpack.c.l.s8.bf16 %v392
        %v673 = vunpack.c.l.s8.bf16 %v393
        %v674 = vunpack.c.l.s8.bf16 %v394
        %v675 = vunpack.c.l.s8.bf16 %v395
        %v676 = vunpack.c.l.s8.bf16 %v396
        %v677 = vunpack.c.l.s8.bf16 %v397
        %v678 = vunpack.c.l.s8.bf16 %v398
        %v679 = vunpack.c.l.s8.bf16 %v399
        %v680 = vunpack.c.l.s8.bf16 %v400
        %v681 = vunpack.c.h.s8.bf16 %v361
        %v682 = vunpack.c.h.s8.bf16 %v362
        %v683 = vunpack.c.h.s8.bf16 %v363
        %v684 = vunpack.c.h.s8.bf16 %v364
        %v685 = vunpack.c.h.s8.bf16 %v365
        %v686 = vunpack.c.h.s8.bf16 %v366
        %v687 = vunpack.c.h.s8.bf16 %v367
        %v688 = vunpack.c.h.s8.bf16 %v368
        %v689 = vunpack.c.h.s8.bf16 %v369
        %v690 = vunpack.c.h.s8.bf16 %v370
        %v691 = vunpack.c.h.s8.bf16 %v371
        %v692 = vunpack.c.h.s8.bf16 %v372
        %v693 = vunpack.c.h.s8.bf16 %v373
        %v694 = vunpack.c.h.s8.bf16 %v374
        %v695 = vunpack.c.h.s8.bf16 %v375
        %v696 = vunpack.c.h.s8.bf16 %v376
        %v697 = vunpack.c.h.s8.bf16 %v377
        %v698 = vunpack.c.h.s8.bf16 %v378
        %v699 = vunpack.c.h.s8.bf16 %v379
        %v700 = vunpack.c.h.s8.bf16 %v380
        %v701 = vunpack.c.h.s8.bf16 %v381
        %v702 = vunpack.c.h.s8.bf16 %v382
        %v703 = vunpack.c.h.s8.bf16 %v383
        %v704 = vunpack.c.h.s8.bf16 %v384
        %v705 = vunpack.c.h.s8.bf16 %v385
        %v706 = vunpack.c.h.s8.bf16 %v386
        %v707 = vunpack.c.h.s8.bf16 %v387
        %v708 = vunpack.c.h.s8.bf16 %v388
        %v709 = vunpack.c.h.s8.bf16 %v389
        %v710 = vunpack.c.h.s8.bf16 %v390
        %v711 = vunpack.c.h.s8.bf16 %v391
        %v712 = vunpack.c.h.s8.bf16 %v392
        %v713 = vunpack.c.h.s8.bf16 %v393
        %v714 = vunpack.c.h.s8.bf16 %v394
        %v715 = vunpack.c.h.s8.bf16 %v395
        %v716 = vunpack.c.h.s8.bf16 %v396
        %v717 = vunpack.c.h.s8.bf16 %v397
        %v718 = vunpack.c.h.s8.bf16 %v398
        %v719 = vunpack.c.h.s8.bf16 %v399
        %v720 = vunpack.c.h.s8.bf16 %v400
        %721 = vmatprep.subr.bf16.mxu0 %v402
        %722 = vmatpush1.bf16.msra.mxu0 %v401
        %723 = vmatprep.subr.bf16.mxu0 %v442
        %724 = vmatpush1.bf16.msra.mxu0 %v441
        %725 = vmatprep.subr.bf16.mxu0 %v482
        %726 = vmatpush1.bf16.msra.mxu0 %v481
        %727 = vmatprep.subr.bf16.mxu0 %v522
        %728 = vmatpush1.bf16.msra.mxu0 %v521
        %729 = vmatprep.subr.bf16.mxu0 %v562
        %730 = vmatpush1.bf16.msra.mxu0 %v561
        %731 = vmatprep.subr.bf16.mxu0 %v602
        %732 = vmatpush1.bf16.msra.mxu0 %v601
        %733 = vmatprep.subr.bf16.mxu0 %v642
        %734 = vmatpush1.bf16.msra.mxu0 %v641
        %735 = vmatprep.subr.bf16.mxu0 %v682
        %736 = vmatpush1.bf16.msra.mxu0 %v681
        %737 = vmatprep.subr.bf16.mxu0 0
        %738 = vmatpush1.bf16.msra.mxu0 0
        %739 = vmatprep.subr.bf16.mxu0 0
        %740 = vmatpush1.bf16.msra.mxu0 0
        %741 = vmatprep.subr.bf16.mxu0 0
        %742 = vmatpush1.bf16.msra.mxu0 0
        %743 = vmatprep.subr.bf16.mxu0 0
        %744 = vmatpush1.bf16.msra.mxu0 0
        %745 = vmatprep.subr.bf16.mxu0 0
        %746 = vmatpush1.bf16.msra.mxu0 0
        %747 = vmatprep.subr.bf16.mxu0 0
        %748 = vmatpush1.bf16.msra.mxu0 0
        %749 = vmatprep.subr.bf16.mxu0 0
        %750 = vmatpush1.bf16.msra.mxu0 0
        %751 = vmatprep.subr.bf16.mxu0 0
        %752 = vmatpush1.bf16.msra.mxu0 0
        %753 = vmatprep.mubr.bf16.mxu0 0
        %754 = vmatmul.mubr.bf16.gmra.mrb[0].mxu0 %v240
        %v755 = vpop.f32.mrb[0].mxu0
        %v756 = vadd.f32 0.0, %v755
        %v757 = vpop.f32.mrb[0].mxu0
        %v758 = vadd.f32 0.0, %v757
        %v759 = vpop.f32.mrb[0].mxu0
        %v760 = vpop.f32.mrb[0].mxu0
        %761 = vdwg.mxu0
        %762 = vmatprep.subr.bf16.mxu0 %v404
        %763 = vmatpush1.bf16.msra.mxu0 %v403
        %764 = vmatprep.subr.bf16.mxu0 %v444
        %765 = vmatpush1.bf16.msra.mxu0 %v443
        %766 = vmatprep.subr.bf16.mxu0 %v484
        %767 = vmatpush1.bf16.msra.mxu0 %v483
        %768 = vmatprep.subr.bf16.mxu0 %v524
        %769 = vmatpush1.bf16.msra.mxu0 %v523
        %770 = vmatprep.subr.bf16.mxu0 %v564
        %771 = vmatpush1.bf16.msra.mxu0 %v563
        %772 = vmatprep.subr.bf16.mxu0 %v604
        %773 = vmatpush1.bf16.msra.mxu0 %v603
        %774 = vmatprep.subr.bf16.mxu0 %v644
        %775 = vmatpush1.bf16.msra.mxu0 %v643
        %776 = vmatprep.subr.bf16.mxu0 %v684
        %777 = vmatpush1.bf16.msra.mxu0 %v683
        %778 = vmatprep.subr.bf16.mxu0 0
        %779 = vmatpush1.bf16.msra.mxu0 0
        %780 = vmatprep.subr.bf16.mxu0 0
        %781 = vmatpush1.bf16.msra.mxu0 0
        %782 = vmatprep.subr.bf16.mxu0 0
        %783 = vmatpush1.bf16.msra.mxu0 0
        %784 = vmatprep.subr.bf16.mxu0 0
        %785 = vmatpush1.bf16.msra.mxu0 0
        %786 = vmatprep.subr.bf16.mxu0 0
        %787 = vmatpush1.bf16.msra.mxu0 0
        %788 = vmatprep.subr.bf16.mxu0 0
        %789 = vmatpush1.bf16.msra.mxu0 0
        %790 = vmatprep.subr.bf16.mxu0 0
        %791 = vmatpush1.bf16.msra.mxu0 0
        %792 = vmatprep.subr.bf16.mxu0 0
        %793 = vmatpush1.bf16.msra.mxu0 0
        %794 = vmatprep.mubr.bf16.mxu0 0
        %795 = vmatmul.mubr.bf16.gmra.mrb[0].mxu0 %v240
        %v796 = vpop.f32.mrb[0].mxu0
        %v797 = vadd.f32 0.0, %v796
        %v798 = vpop.f32.mrb[0].mxu0
        %v799 = vadd.f32 0.0, %v798
        %v800 = vpop.f32.mrb[0].mxu0
        %v801 = vpop.f32.mrb[0].mxu0
        %802 = vdwg.mxu0
        %803 = vmatprep.subr.bf16.mxu0 %v406
        %804 = vmatpush1.bf16.msra.mxu0 %v405
        %805 = vmatprep.subr.bf16.mxu0 %v446
        %806 = vmatpush1.bf16.msra.mxu0 %v445
        %807 = vmatprep.subr.bf16.mxu0 %v486
        %808 = vmatpush1.bf16.msra.mxu0 %v485
        %809 = vmatprep.subr.bf16.mxu0 %v526
        %810 = vmatpush1.bf16.msra.mxu0 %v525
        %811 = vmatprep.subr.bf16.mxu0 %v566
        %812 = vmatpush1.bf16.msra.mxu0 %v565
        %813 = vmatprep.subr.bf16.mxu0 %v606
        %814 = vmatpush1.bf16.msra.mxu0 %v605
        %815 = vmatprep.subr.bf16.mxu0 %v646
        %816 = vmatpush1.bf16.msra.mxu0 %v645
        %817 = vmatprep.subr.bf16.mxu0 %v686
        %818 = vmatpush1.bf16.msra.mxu0 %v685
        %819 = vmatprep.subr.bf16.mxu0 0
        %820 = vmatpush1.bf16.msra.mxu0 0
        %821 = vmatprep.subr.bf16.mxu0 0
        %822 = vmatpush1.bf16.msra.mxu0 0
        %823 = vmatprep.subr.bf16.mxu0 0
        %824 = vmatpush1.bf16.msra.mxu0 0
        %825 = vmatprep.subr.bf16.mxu0 0
        %826 = vmatpush1.bf16.msra.mxu0 0
        %827 = vmatprep.subr.bf16.mxu0 0
        %828 = vmatpush1.bf16.msra.mxu0 0
        %829 = vmatprep.subr.bf16.mxu0 0
        %830 = vmatpush1.bf16.msra.mxu0 0
        %831 = vmatprep.subr.bf16.mxu0 0
        %832 = vmatpush1.bf16.msra.mxu0 0
        %833 = vmatprep.subr.bf16.mxu0 0
        %834 = vmatpush1.bf16.msra.mxu0 0
        %835 = vmatprep.mubr.bf16.mxu0 0
        %836 = vmatmul.mubr.bf16.gmra.mrb[0].mxu0 %v240
        %v837 = vpop.f32.mrb[0].mxu0
        %v838 = vadd.f32 0.0, %v837
        %v839 = vpop.f32.mrb[0].mxu0
        %v840 = vadd.f32 0.0, %v839
        %v841 = vpop.f32.mrb[0].mxu0
        %v842 = vpop.f32.mrb[0].mxu0
        %843 = vdwg.mxu0
        %844 = vmatprep.subr.bf16.mxu0 %v408
        %845 = vmatpush1.bf16.msra.mxu0 %v407
        %846 = vmatprep.subr.bf16.mxu0 %v448
        %847 = vmatpush1.bf16.msra.mxu0 %v447
        %848 = vmatprep.subr.bf16.mxu0 %v488
        %849 = vmatpush1.bf16.msra.mxu0 %v487
        %850 = vmatprep.subr.bf16.mxu0 %v528
        %851 = vmatpush1.bf16.msra.mxu0 %v527
        %852 = vmatprep.subr.bf16.mxu0 %v568
        %853 = vmatpush1.bf16.msra.mxu0 %v567
        %854 = vmatprep.subr.bf16.mxu0 %v608
        %855 = vmatpush1.bf16.msra.mxu0 %v607
        %856 = vmatprep.subr.bf16.mxu0 %v648
        %857 = vmatpush1.bf16.msra.mxu0 %v647
        %858 = vmatprep.subr.bf16.mxu0 %v688
        %859 = vmatpush1.bf16.msra.mxu0 %v687
        %860 = vmatprep.subr.bf16.mxu0 0
        %861 = vmatpush1.bf16.msra.mxu0 0
        %862 = vmatprep.subr.bf16.mxu0 0
        %863 = vmatpush1.bf16.msra.mxu0 0
        %864 = vmatprep.subr.bf16.mxu0 0
        %865 = vmatpush1.bf16.msra.mxu0 0
        %866 = vmatprep.subr.bf16.mxu0 0
        %867 = vmatpush1.bf16.msra.mxu0 0
        %868 = vmatprep.subr.bf16.mxu0 0
        %869 = vmatpush1.bf16.msra.mxu0 0
        %870 = vmatprep.subr.bf16.mxu0 0
        %871 = vmatpush1.bf16.msra.mxu0 0
        %872 = vmatprep.subr.bf16.mxu0 0
        %873 = vmatpush1.bf16.msra.mxu0 0
        %874 = vmatprep.subr.bf16.mxu0 0
        %875 = vmatpush1.bf16.msra.mxu0 0
        %876 = vmatprep.mubr.bf16.mxu0 0
        %877 = vmatmul.mubr.bf16.gmra.mrb[0].mxu0 %v240
        %v878 = vpop.f32.mrb[0].mxu0
        %v879 = vadd.f32 0.0, %v878
        %v880 = vpop.f32.mrb[0].mxu0
        %v881 = vadd.f32 0.0, %v880
        %v882 = vpop.f32.mrb[0].mxu0
        %v883 = vpop.f32.mrb[0].mxu0
        %884 = vdwg.mxu0
        %885 = vmatprep.subr.bf16.mxu0 %v410
        %886 = vmatpush1.bf16.msra.mxu0 %v409
        %887 = vmatprep.subr.bf16.mxu0 %v450
        %888 = vmatpush1.bf16.msra.mxu0 %v449
        %889 = vmatprep.subr.bf16.mxu0 %v490
        %890 = vmatpush1.bf16.msra.mxu0 %v489
        %891 = vmatprep.subr.bf16.mxu0 %v530
        %892 = vmatpush1.bf16.msra.mxu0 %v529
        %893 = vmatprep.subr.bf16.mxu0 %v570
        %894 = vmatpush1.bf16.msra.mxu0 %v569
        %895 = vmatprep.subr.bf16.mxu0 %v610
        %896 = vmatpush1.bf16.msra.mxu0 %v609
        %897 = vmatprep.subr.bf16.mxu0 %v650
        %898 = vmatpush1.bf16.msra.mxu0 %v649
        %899 = vmatprep.subr.bf16.mxu0 %v690
        %900 = vmatpush1.bf16.msra.mxu0 %v689
        %901 = vmatprep.subr.bf16.mxu0 0
        %902 = vmatpush1.bf16.msra.mxu0 0
        %903 = vmatprep.subr.bf16.mxu0 0
        %904 = vmatpush1.bf16.msra.mxu0 0
        %905 = vmatprep.subr.bf16.mxu0 0
        %906 = vmatpush1.bf16.msra.mxu0 0
        %907 = vmatprep.subr.bf16.mxu0 0
        %908 = vmatpush1.bf16.msra.mxu0 0
        %909 = vmatprep.subr.bf16.mxu0 0
        %910 = vmatpush1.bf16.msra.mxu0 0
        %911 = vmatprep.subr.bf16.mxu0 0
        %912 = vmatpush1.bf16.msra.mxu0 0
        %913 = vmatprep.subr.bf16.mxu0 0
        %914 = vmatpush1.bf16.msra.mxu0 0
        %915 = vmatprep.subr.bf16.mxu0 0
        %916 = vmatpush1.bf16.msra.mxu0 0
        %917 = vmatprep.mubr.bf16.mxu0 0
        %918 = vmatmul.mubr.bf16.gmra.mrb[0].mxu0 %v240
        %v919 = vpop.f32.mrb[0].mxu0
        %v920 = vadd.f32 0.0, %v919
        %v921 = vpop.f32.mrb[0].mxu0
        %v922 = vadd.f32 0.0, %v921
        %v923 = vpop.f32.mrb[0].mxu0
        %v924 = vpop.f32.mrb[0].mxu0
        %925 = vdwg.mxu0
        %926 = vmatprep.subr.bf16.mxu0 %v412
        %927 = vmatpush1.bf16.msra.mxu0 %v411
        %928 = vmatprep.subr.bf16.mxu0 %v452
        %929 = vmatpush1.bf16.msra.mxu0 %v451
        %930 = vmatprep.subr.bf16.mxu0 %v492
        %931 = vmatpush1.bf16.msra.mxu0 %v491
        %932 = vmatprep.subr.bf16.mxu0 %v532
        %933 = vmatpush1.bf16.msra.mxu0 %v531
        %934 = vmatprep.subr.bf16.mxu0 %v572
        %935 = vmatpush1.bf16.msra.mxu0 %v571
        %936 = vmatprep.subr.bf16.mxu0 %v612
        %937 = vmatpush1.bf16.msra.mxu0 %v611
        %938 = vmatprep.subr.bf16.mxu0 %v652
        %939 = vmatpush1.bf16.msra.mxu0 %v651
        %940 = vmatprep.subr.bf16.mxu0 %v692
        %941 = vmatpush1.bf16.msra.mxu0 %v691
        %942 = vmatprep.subr.bf16.mxu0 0
        %943 = vmatpush1.bf16.msra.mxu0 0
        %944 = vmatprep.subr.bf16.mxu0 0
        %945 = vmatpush1.bf16.msra.mxu0 0
        %946 = vmatprep.subr.bf16.mxu0 0
        %947 = vmatpush1.bf16.msra.mxu0 0
        %948 = vmatprep.subr.bf16.mxu0 0
        %949 = vmatpush1.bf16.msra.mxu0 0
        %950 = vmatprep.subr.bf16.mxu0 0
        %951 = vmatpush1.bf16.msra.mxu0 0
        %952 = vmatprep.subr.bf16.mxu0 0
        %953 = vmatpush1.bf16.msra.mxu0 0
        %954 = vmatprep.subr.bf16.mxu0 0
        %955 = vmatpush1.bf16.msra.mxu0 0
        %956 = vmatprep.subr.bf16.mxu0 0
        %957 = vmatpush1.bf16.msra.mxu0 0
        %958 = vmatprep.mubr.bf16.mxu0 0
        %959 = vmatmul.mubr.bf16.gmra.mrb[0].mxu0 %v240
        %v960 = vpop.f32.mrb[0].mxu0
        %v961 = vadd.f32 0.0, %v960
        %v962 = vpop.f32.mrb[0].mxu0
        %v963 = vadd.f32 0.0, %v962
        %v964 = vpop.f32.mrb[0].mxu0
        %v965 = vpop.f32.mrb[0].mxu0
        %966 = vdwg.mxu0
        %967 = vmatprep.subr.bf16.mxu0 %v414
        %968 = vmatpush1.bf16.msra.mxu0 %v413
        %969 = vmatprep.subr.bf16.mxu0 %v454
        %970 = vmatpush1.bf16.msra.mxu0 %v453
        %971 = vmatprep.subr.bf16.mxu0 %v494
        %972 = vmatpush1.bf16.msra.mxu0 %v493
        %973 = vmatprep.subr.bf16.mxu0 %v534
        %974 = vmatpush1.bf16.msra.mxu0 %v533
        %975 = vmatprep.subr.bf16.mxu0 %v574
        %976 = vmatpush1.bf16.msra.mxu0 %v573
        %977 = vmatprep.subr.bf16.mxu0 %v614
        %978 = vmatpush1.bf16.msra.mxu0 %v613
        %979 = vmatprep.subr.bf16.mxu0 %v654
        %980 = vmatpush1.bf16.msra.mxu0 %v653
        %981 = vmatprep.subr.bf16.mxu0 %v694
        %982 = vmatpush1.bf16.msra.mxu0 %v693
        %983 = vmatprep.subr.bf16.mxu0 0
        %984 = vmatpush1.bf16.msra.mxu0 0
        %985 = vmatprep.subr.bf16.mxu0 0
        %986 = vmatpush1.bf16.msra.mxu0 0
        %987 = vmatprep.subr.bf16.mxu0 0
        %988 = vmatpush1.bf16.msra.mxu0 0
        %989 = vmatprep.subr.bf16.mxu0 0
        %990 = vmatpush1.bf16.msra.mxu0 0
        %991 = vmatprep.subr.bf16.mxu0 0
        %992 = vmatpush1.bf16.msra.mxu0 0
        %993 = vmatprep.subr.bf16.mxu0 0
        %994 = vmatpush1.bf16.msra.mxu0 0
        %995 = vmatprep.subr.bf16.mxu0 0
        %996 = vmatpush1.bf16.msra.mxu0 0
        %997 = vmatprep.subr.bf16.mxu0 0
        %998 = vmatpush1.bf16.msra.mxu0 0
        %999 = vmatprep.mubr.bf16.mxu0 0
        %1000 = vmatmul.mubr.bf16.gmra.mrb[0].mxu0 %v240
        %v1001 = vpop.f32.mrb[0].mxu0
        %v1002 = vadd.f32 0.0, %v1001
        %v1003 = vpop.f32.mrb[0].mxu0
        %v1004 = vadd.f32 0.0, %v1003
        %v1005 = vpop.f32.mrb[0].mxu0
        %v1006 = vpop.f32.mrb[0].mxu0
        %1007 = vdwg.mxu0
        %1008 = vmatprep.subr.bf16.mxu0 %v416
        %1009 = vmatpush1.bf16.msra.mxu0 %v415
        %1010 = vmatprep.subr.bf16.mxu0 %v456
        %1011 = vmatpush1.bf16.msra.mxu0 %v455
        %1012 = vmatprep.subr.bf16.mxu0 %v496
        %1013 = vmatpush1.bf16.msra.mxu0 %v495
        %1014 = vmatprep.subr.bf16.mxu0 %v536
        %1015 = vmatpush1.bf16.msra.mxu0 %v535
        %1016 = vmatprep.subr.bf16.mxu0 %v576
        %1017 = vmatpush1.bf16.msra.mxu0 %v575
        %1018 = vmatprep.subr.bf16.mxu0 %v616
        %1019 = vmatpush1.bf16.msra.mxu0 %v615
        %1020 = vmatprep.subr.bf16.mxu0 %v656
        %1021 = vmatpush1.bf16.msra.mxu0 %v655
        %1022 = vmatprep.subr.bf16.mxu0 %v696
        %1023 = vmatpush1.bf16.msra.mxu0 %v695
        %1024 = vmatprep.subr.bf16.mxu0 0
        %1025 = vmatpush1.bf16.msra.mxu0 0
        %1026 = vmatprep.subr.bf16.mxu0 0
        %1027 = vmatpush1.bf16.msra.mxu0 0
        %1028 = vmatprep.subr.bf16.mxu0 0
        %1029 = vmatpush1.bf16.msra.mxu0 0
        %1030 = vmatprep.subr.bf16.mxu0 0
        %1031 = vmatpush1.bf16.msra.mxu0 0
        %1032 = vmatprep.subr.bf16.mxu0 0
        %1033 = vmatpush1.bf16.msra.mxu0 0
        %1034 = vmatprep.subr.bf16.mxu0 0
        %1035 = vmatpush1.bf16.msra.mxu0 0
        %1036 = vmatprep.subr.bf16.mxu0 0
        %1037 = vmatpush1.bf16.msra.mxu0 0
        %1038 = vmatprep.subr.bf16.mxu0 0
        %1039 = vmatpush1.bf16.msra.mxu0 0
        %1040 = vmatprep.mubr.bf16.mxu0 0
        %1041 = vmatmul.mubr.bf16.gmra.mrb[0].mxu0 %v240
        %v1042 = vpop.f32.mrb[0].mxu0
        %v1043 = vadd.f32 0.0, %v1042
        %v1044 = vpop.f32.mrb[0].mxu0
        %v1045 = vadd.f32 0.0, %v1044
        %v1046 = vpop.f32.mrb[0].mxu0
        %v1047 = vpop.f32.mrb[0].mxu0
        %1048 = vdwg.mxu0
        %1049 = vmatprep.subr.bf16.mxu0 %v418
        %1050 = vmatpush1.bf16.msra.mxu0 %v417
        %1051 = vmatprep.subr.bf16.mxu0 %v458
        %1052 = vmatpush1.bf16.msra.mxu0 %v457
        %1053 = vmatprep.subr.bf16.mxu0 %v498
        %1054 = vmatpush1.bf16.msra.mxu0 %v497
        %1055 = vmatprep.subr.bf16.mxu0 %v538
        %1056 = vmatpush1.bf16.msra.mxu0 %v537
        %1057 = vmatprep.subr.bf16.mxu0 %v578
        %1058 = vmatpush1.bf16.msra.mxu0 %v577
        %1059 = vmatprep.subr.bf16.mxu0 %v618
        %1060 = vmatpush1.bf16.msra.mxu0 %v617
        %1061 = vmatprep.subr.bf16.mxu0 %v658
        %1062 = vmatpush1.bf16.msra.mxu0 %v657
        %1063 = vmatprep.subr.bf16.mxu0 %v698
        %1064 = vmatpush1.bf16.msra.mxu0 %v697
        %1065 = vmatprep.subr.bf16.mxu0 0
        %1066 = vmatpush1.bf16.msra.mxu0 0
        %1067 = vmatprep.subr.bf16.mxu0 0
        %1068 = vmatpush1.bf16.msra.mxu0 0
        %1069 = vmatprep.subr.bf16.mxu0 0
        %1070 = vmatpush1.bf16.msra.mxu0 0
        %1071 = vmatprep.subr.bf16.mxu0 0
        %1072 = vmatpush1.bf16.msra.mxu0 0
        %1073 = vmatprep.subr.bf16.mxu0 0
        %1074 = vmatpush1.bf16.msra.mxu0 0
        %1075 = vmatprep.subr.bf16.mxu0 0
        %1076 = vmatpush1.bf16.msra.mxu0 0
        %1077 = vmatprep.subr.bf16.mxu0 0
        %1078 = vmatpush1.bf16.msra.mxu0 0
        %1079 = vmatprep.subr.bf16.mxu0 0
        %1080 = vmatpush1.bf16.msra.mxu0 0
        %1081 = vmatprep.mubr.bf16.mxu0 0
        %1082 = vmatmul.mubr.bf16.gmra.mrb[0].mxu0 %v240
        %v1083 = vpop.f32.mrb[0].mxu0
        %v1084 = vadd.f32 0.0, %v1083
        %v1085 = vpop.f32.mrb[0].mxu0
        %v1086 = vadd.f32 0.0, %v1085
        %v1087 = vpop.f32.mrb[0].mxu0
        %v1088 = vpop.f32.mrb[0].mxu0
        %1089 = vdwg.mxu0
        %1090 = vmatprep.subr.bf16.mxu0 %v420
        %1091 = vmatpush1.bf16.msra.mxu0 %v419
        %1092 = vmatprep.subr.bf16.mxu0 %v460
        %1093 = vmatpush1.bf16.msra.mxu0 %v459
        %1094 = vmatprep.subr.bf16.mxu0 %v500
        %1095 = vmatpush1.bf16.msra.mxu0 %v499
        %1096 = vmatprep.subr.bf16.mxu0 %v540
        %1097 = vmatpush1.bf16.msra.mxu0 %v539
        %1098 = vmatprep.subr.bf16.mxu0 %v580
        %1099 = vmatpush1.bf16.msra.mxu0 %v579
        %1100 = vmatprep.subr.bf16.mxu0 %v620
        %1101 = vmatpush1.bf16.msra.mxu0 %v619
        %1102 = vmatprep.subr.bf16.mxu0 %v660
        %1103 = vmatpush1.bf16.msra.mxu0 %v659
        %1104 = vmatprep.subr.bf16.mxu0 %v700
        %1105 = vmatpush1.bf16.msra.mxu0 %v699
        %1106 = vmatprep.subr.bf16.mxu0 0
        %1107 = vmatpush1.bf16.msra.mxu0 0
        %1108 = vmatprep.subr.bf16.mxu0 0
        %1109 = vmatpush1.bf16.msra.mxu0 0
        %1110 = vmatprep.subr.bf16.mxu0 0
        %1111 = vmatpush1.bf16.msra.mxu0 0
        %1112 = vmatprep.subr.bf16.mxu0 0
        %1113 = vmatpush1.bf16.msra.mxu0 0
        %1114 = vmatprep.subr.bf16.mxu0 0
        %1115 = vmatpush1.bf16.msra.mxu0 0
        %1116 = vmatprep.subr.bf16.mxu0 0
        %1117 = vmatpush1.bf16.msra.mxu0 0
        %1118 = vmatprep.subr.bf16.mxu0 0
        %1119 = vmatpush1.bf16.msra.mxu0 0
        %1120 = vmatprep.subr.bf16.mxu0 0
        %1121 = vmatpush1.bf16.msra.mxu0 0
        %1122 = vmatprep.mubr.bf16.mxu0 0
        %1123 = vmatmul.mubr.bf16.gmra.mrb[0].mxu0 %v240
        %v1124 = vpop.f32.mrb[0].mxu0
        %v1125 = vadd.f32 0.0, %v1124
        %v1126 = vpop.f32.mrb[0].mxu0
        %v1127 = vadd.f32 0.0, %v1126
        %v1128 = vpop.f32.mrb[0].mxu0
        %v1129 = vpop.f32.mrb[0].mxu0
        %1130 = vdwg.mxu0
        %1131 = vmatprep.subr.bf16.mxu0 %v422
        %1132 = vmatpush1.bf16.msra.mxu0 %v421
        %1133 = vmatprep.subr.bf16.mxu0 %v462
        %1134 = vmatpush1.bf16.msra.mxu0 %v461
        %1135 = vmatprep.subr.bf16.mxu0 %v502
        %1136 = vmatpush1.bf16.msra.mxu0 %v501
        %1137 = vmatprep.subr.bf16.mxu0 %v542
        %1138 = vmatpush1.bf16.msra.mxu0 %v541
        %1139 = vmatprep.subr.bf16.mxu0 %v582
        %1140 = vmatpush1.bf16.msra.mxu0 %v581
        %1141 = vmatprep.subr.bf16.mxu0 %v622
        %1142 = vmatpush1.bf16.msra.mxu0 %v621
        %1143 = vmatprep.subr.bf16.mxu0 %v662
        %1144 = vmatpush1.bf16.msra.mxu0 %v661
        %1145 = vmatprep.subr.bf16.mxu0 %v702
        %1146 = vmatpush1.bf16.msra.mxu0 %v701
        %1147 = vmatprep.subr.bf16.mxu0 0
        %1148 = vmatpush1.bf16.msra.mxu0 0
        %1149 = vmatprep.subr.bf16.mxu0 0
        %1150 = vmatpush1.bf16.msra.mxu0 0
        %1151 = vmatprep.subr.bf16.mxu0 0
        %1152 = vmatpush1.bf16.msra.mxu0 0
        %1153 = vmatprep.subr.bf16.mxu0 0
        %1154 = vmatpush1.bf16.msra.mxu0 0
        %1155 = vmatprep.subr.bf16.mxu0 0
        %1156 = vmatpush1.bf16.msra.mxu0 0
        %1157 = vmatprep.subr.bf16.mxu0 0
        %1158 = vmatpush1.bf16.msra.mxu0 0
        %1159 = vmatprep.subr.bf16.mxu0 0
        %1160 = vmatpush1.bf16.msra.mxu0 0
        %1161 = vmatprep.subr.bf16.mxu0 0
        %1162 = vmatpush1.bf16.msra.mxu0 0
        %1163 = vmatprep.mubr.bf16.mxu0 0
        %1164 = vmatmul.mubr.bf16.gmra.mrb[0].mxu0 %v240
        %v1165 = vpop.f32.mrb[0].mxu0
        %v1166 = vadd.f32 0.0, %v1165
        %v1167 = vpop.f32.mrb[0].mxu0
        %v1168 = vadd.f32 0.0, %v1167
        %v1169 = vpop.f32.mrb[0].mxu0
        %v1170 = vpop.f32.mrb[0].mxu0
        %1171 = vdwg.mxu0
        %1172 = vmatprep.subr.bf16.mxu0 %v424
        %1173 = vmatpush1.bf16.msra.mxu0 %v423
        %1174 = vmatprep.subr.bf16.mxu0 %v464
        %1175 = vmatpush1.bf16.msra.mxu0 %v463
        %1176 = vmatprep.subr.bf16.mxu0 %v504
        %1177 = vmatpush1.bf16.msra.mxu0 %v503
        %1178 = vmatprep.subr.bf16.mxu0 %v544
        %1179 = vmatpush1.bf16.msra.mxu0 %v543
        %1180 = vmatprep.subr.bf16.mxu0 %v584
        %1181 = vmatpush1.bf16.msra.mxu0 %v583
        %1182 = vmatprep.subr.bf16.mxu0 %v624
        %1183 = vmatpush1.bf16.msra.mxu0 %v623
        %1184 = vmatprep.subr.bf16.mxu0 %v664
        %1185 = vmatpush1.bf16.msra.mxu0 %v663
        %1186 = vmatprep.subr.bf16.mxu0 %v704
        %1187 = vmatpush1.bf16.msra.mxu0 %v703
        %1188 = vmatprep.subr.bf16.mxu0 0
        %1189 = vmatpush1.bf16.msra.mxu0 0
        %1190 = vmatprep.subr.bf16.mxu0 0
        %1191 = vmatpush1.bf16.msra.mxu0 0
        %1192 = vmatprep.subr.bf16.mxu0 0
        %1193 = vmatpush1.bf16.msra.mxu0 0
        %1194 = vmatprep.subr.bf16.mxu0 0
        %1195 = vmatpush1.bf16.msra.mxu0 0
        %1196 = vmatprep.subr.bf16.mxu0 0
        %1197 = vmatpush1.bf16.msra.mxu0 0
        %1198 = vmatprep.subr.bf16.mxu0 0
        %1199 = vmatpush1.bf16.msra.mxu0 0
        %1200 = vmatprep.subr.bf16.mxu0 0
        %1201 = vmatpush1.bf16.msra.mxu0 0
        %1202 = vmatprep.subr.bf16.mxu0 0
        %1203 = vmatpush1.bf16.msra.mxu0 0
        %1204 = vmatprep.mubr.bf16.mxu0 0
        %1205 = vmatmul.mubr.bf16.gmra.mrb[0].mxu0 %v240
        %v1206 = vpop.f32.mrb[0].mxu0
        %v1207 = vadd.f32 0.0, %v1206
        %v1208 = vpop.f32.mrb[0].mxu0
        %v1209 = vadd.f32 0.0, %v1208
        %v1210 = vpop.f32.mrb[0].mxu0
        %v1211 = vpop.f32.mrb[0].mxu0
        %1212 = vdwg.mxu0
        %1213 = vmatprep.subr.bf16.mxu0 %v426
        %1214 = vmatpush1.bf16.msra.mxu0 %v425
        %1215 = vmatprep.subr.bf16.mxu0 %v466
        %1216 = vmatpush1.bf16.msra.mxu0 %v465
        %1217 = vmatprep.subr.bf16.mxu0 %v506
        %1218 = vmatpush1.bf16.msra.mxu0 %v505
        %1219 = vmatprep.subr.bf16.mxu0 %v546
        %1220 = vmatpush1.bf16.msra.mxu0 %v545
        %1221 = vmatprep.subr.bf16.mxu0 %v586
        %1222 = vmatpush1.bf16.msra.mxu0 %v585
        %1223 = vmatprep.subr.bf16.mxu0 %v626
        %1224 = vmatpush1.bf16.msra.mxu0 %v625
        %1225 = vmatprep.subr.bf16.mxu0 %v666
        %1226 = vmatpush1.bf16.msra.mxu0 %v665
        %1227 = vmatprep.subr.bf16.mxu0 %v706
        %1228 = vmatpush1.bf16.msra.mxu0 %v705
        %1229 = vmatprep.subr.bf16.mxu0 0
        %1230 = vmatpush1.bf16.msra.mxu0 0
        %1231 = vmatprep.subr.bf16.mxu0 0
        %1232 = vmatpush1.bf16.msra.mxu0 0
        %1233 = vmatprep.subr.bf16.mxu0 0
        %1234 = vmatpush1.bf16.msra.mxu0 0
        %1235 = vmatprep.subr.bf16.mxu0 0
        %1236 = vmatpush1.bf16.msra.mxu0 0
        %1237 = vmatprep.subr.bf16.mxu0 0
        %1238 = vmatpush1.bf16.msra.mxu0 0
        %1239 = vmatprep.subr.bf16.mxu0 0
        %1240 = vmatpush1.bf16.msra.mxu0 0
        %1241 = vmatprep.subr.bf16.mxu0 0
        %1242 = vmatpush1.bf16.msra.mxu0 0
        %1243 = vmatprep.subr.bf16.mxu0 0
        %1244 = vmatpush1.bf16.msra.mxu0 0
        %1245 = vmatprep.mubr.bf16.mxu0 0
        %1246 = vmatmul.mubr.bf16.gmra.mrb[0].mxu0 %v240
        %v1247 = vpop.f32.mrb[0].mxu0
        %v1248 = vadd.f32 0.0, %v1247
        %v1249 = vpop.f32.mrb[0].mxu0
        %v1250 = vadd.f32 0.0, %v1249
        %v1251 = vpop.f32.mrb[0].mxu0
        %v1252 = vpop.f32.mrb[0].mxu0
        %1253 = vdwg.mxu0
        %1254 = vmatprep.subr.bf16.mxu0 %v428
        %1255 = vmatpush1.bf16.msra.mxu0 %v427
        %1256 = vmatprep.subr.bf16.mxu0 %v468
        %1257 = vmatpush1.bf16.msra.mxu0 %v467
        %1258 = vmatprep.subr.bf16.mxu0 %v508
        %1259 = vmatpush1.bf16.msra.mxu0 %v507
        %1260 = vmatprep.subr.bf16.mxu0 %v548
        %1261 = vmatpush1.bf16.msra.mxu0 %v547
        %1262 = vmatprep.subr.bf16.mxu0 %v588
        %1263 = vmatpush1.bf16.msra.mxu0 %v587
        %1264 = vmatprep.subr.bf16.mxu0 %v628
        %1265 = vmatpush1.bf16.msra.mxu0 %v627
        %1266 = vmatprep.subr.bf16.mxu0 %v668
        %1267 = vmatpush1.bf16.msra.mxu0 %v667
        %1268 = vmatprep.subr.bf16.mxu0 %v708
        %1269 = vmatpush1.bf16.msra.mxu0 %v707
        %1270 = vmatprep.subr.bf16.mxu0 0
        %1271 = vmatpush1.bf16.msra.mxu0 0
        %1272 = vmatprep.subr.bf16.mxu0 0
        %1273 = vmatpush1.bf16.msra.mxu0 0
        %1274 = vmatprep.subr.bf16.mxu0 0
        %1275 = vmatpush1.bf16.msra.mxu0 0
        %1276 = vmatprep.subr.bf16.mxu0 0
        %1277 = vmatpush1.bf16.msra.mxu0 0
        %1278 = vmatprep.subr.bf16.mxu0 0
        %1279 = vmatpush1.bf16.msra.mxu0 0
        %1280 = vmatprep.subr.bf16.mxu0 0
        %1281 = vmatpush1.bf16.msra.mxu0 0
        %1282 = vmatprep.subr.bf16.mxu0 0
        %1283 = vmatpush1.bf16.msra.mxu0 0
        %1284 = vmatprep.subr.bf16.mxu0 0
        %1285 = vmatpush1.bf16.msra.mxu0 0
        %1286 = vmatprep.mubr.bf16.mxu0 0
        %1287 = vmatmul.mubr.bf16.gmra.mrb[0].mxu0 %v240
        %v1288 = vpop.f32.mrb[0].mxu0
        %v1289 = vadd.f32 0.0, %v1288
        %v1290 = vpop.f32.mrb[0].mxu0
        %v1291 = vadd.f32 0.0, %v1290
        %v1292 = vpop.f32.mrb[0].mxu0
        %v1293 = vpop.f32.mrb[0].mxu0
        %1294 = vdwg.mxu0
        %1295 = vmatprep.subr.bf16.mxu0 %v430
        %1296 = vmatpush1.bf16.msra.mxu0 %v429
        %1297 = vmatprep.subr.bf16.mxu0 %v470
        %1298 = vmatpush1.bf16.msra.mxu0 %v469
        %1299 = vmatprep.subr.bf16.mxu0 %v510
        %1300 = vmatpush1.bf16.msra.mxu0 %v509
        %1301 = vmatprep.subr.bf16.mxu0 %v550
        %1302 = vmatpush1.bf16.msra.mxu0 %v549
        %1303 = vmatprep.subr.bf16.mxu0 %v590
        %1304 = vmatpush1.bf16.msra.mxu0 %v589
        %1305 = vmatprep.subr.bf16.mxu0 %v630
        %1306 = vmatpush1.bf16.msra.mxu0 %v629
        %1307 = vmatprep.subr.bf16.mxu0 %v670
        %1308 = vmatpush1.bf16.msra.mxu0 %v669
        %1309 = vmatprep.subr.bf16.mxu0 %v710
        %1310 = vmatpush1.bf16.msra.mxu0 %v709
        %1311 = vmatprep.subr.bf16.mxu0 0
        %1312 = vmatpush1.bf16.msra.mxu0 0
        %1313 = vmatprep.subr.bf16.mxu0 0
        %1314 = vmatpush1.bf16.msra.mxu0 0
        %1315 = vmatprep.subr.bf16.mxu0 0
        %1316 = vmatpush1.bf16.msra.mxu0 0
        %1317 = vmatprep.subr.bf16.mxu0 0
        %1318 = vmatpush1.bf16.msra.mxu0 0
        %1319 = vmatprep.subr.bf16.mxu0 0
        %1320 = vmatpush1.bf16.msra.mxu0 0
        %1321 = vmatprep.subr.bf16.mxu0 0
        %1322 = vmatpush1.bf16.msra.mxu0 0
        %1323 = vmatprep.subr.bf16.mxu0 0
        %1324 = vmatpush1.bf16.msra.mxu0 0
        %1325 = vmatprep.subr.bf16.mxu0 0
        %1326 = vmatpush1.bf16.msra.mxu0 0
        %1327 = vmatprep.mubr.bf16.mxu0 0
        %1328 = vmatmul.mubr.bf16.gmra.mrb[0].mxu0 %v240
        %v1329 = vpop.f32.mrb[0].mxu0
        %v1330 = vadd.f32 0.0, %v1329
        %v1331 = vpop.f32.mrb[0].mxu0
        %v1332 = vadd.f32 0.0, %v1331
        %v1333 = vpop.f32.mrb[0].mxu0
        %v1334 = vpop.f32.mrb[0].mxu0
        %1335 = vdwg.mxu0
        %1336 = vmatprep.subr.bf16.mxu0 %v432
        %1337 = vmatpush1.bf16.msra.mxu0 %v431
        %1338 = vmatprep.subr.bf16.mxu0 %v472
        %1339 = vmatpush1.bf16.msra.mxu0 %v471
        %1340 = vmatprep.subr.bf16.mxu0 %v512
        %1341 = vmatpush1.bf16.msra.mxu0 %v511
        %1342 = vmatprep.subr.bf16.mxu0 %v552
        %1343 = vmatpush1.bf16.msra.mxu0 %v551
        %1344 = vmatprep.subr.bf16.mxu0 %v592
        %1345 = vmatpush1.bf16.msra.mxu0 %v591
        %1346 = vmatprep.subr.bf16.mxu0 %v632
        %1347 = vmatpush1.bf16.msra.mxu0 %v631
        %1348 = vmatprep.subr.bf16.mxu0 %v672
        %1349 = vmatpush1.bf16.msra.mxu0 %v671
        %1350 = vmatprep.subr.bf16.mxu0 %v712
        %1351 = vmatpush1.bf16.msra.mxu0 %v711
        %1352 = vmatprep.subr.bf16.mxu0 0
        %1353 = vmatpush1.bf16.msra.mxu0 0
        %1354 = vmatprep.subr.bf16.mxu0 0
        %1355 = vmatpush1.bf16.msra.mxu0 0
        %1356 = vmatprep.subr.bf16.mxu0 0
        %1357 = vmatpush1.bf16.msra.mxu0 0
        %1358 = vmatprep.subr.bf16.mxu0 0
        %1359 = vmatpush1.bf16.msra.mxu0 0
        %1360 = vmatprep.subr.bf16.mxu0 0
        %1361 = vmatpush1.bf16.msra.mxu0 0
        %1362 = vmatprep.subr.bf16.mxu0 0
        %1363 = vmatpush1.bf16.msra.mxu0 0
        %1364 = vmatprep.subr.bf16.mxu0 0
        %1365 = vmatpush1.bf16.msra.mxu0 0
        %1366 = vmatprep.subr.bf16.mxu0 0
        %1367 = vmatpush1.bf16.msra.mxu0 0
        %1368 = vmatprep.mubr.bf16.mxu0 0
        %1369 = vmatmul.mubr.bf16.gmra.mrb[0].mxu0 %v240
        %v1370 = vpop.f32.mrb[0].mxu0
        %v1371 = vadd.f32 0.0, %v1370
        %v1372 = vpop.f32.mrb[0].mxu0
        %v1373 = vadd.f32 0.0, %v1372
        %v1374 = vpop.f32.mrb[0].mxu0
        %v1375 = vpop.f32.mrb[0].mxu0
        %1376 = vdwg.mxu0
        %1377 = vmatprep.subr.bf16.mxu0 %v434
        %1378 = vmatpush1.bf16.msra.mxu0 %v433
        %1379 = vmatprep.subr.bf16.mxu0 %v474
        %1380 = vmatpush1.bf16.msra.mxu0 %v473
        %1381 = vmatprep.subr.bf16.mxu0 %v514
        %1382 = vmatpush1.bf16.msra.mxu0 %v513
        %1383 = vmatprep.subr.bf16.mxu0 %v554
        %1384 = vmatpush1.bf16.msra.mxu0 %v553
        %1385 = vmatprep.subr.bf16.mxu0 %v594
        %1386 = vmatpush1.bf16.msra.mxu0 %v593
        %1387 = vmatprep.subr.bf16.mxu0 %v634
        %1388 = vmatpush1.bf16.msra.mxu0 %v633
        %1389 = vmatprep.subr.bf16.mxu0 %v674
        %1390 = vmatpush1.bf16.msra.mxu0 %v673
        %1391 = vmatprep.subr.bf16.mxu0 %v714
        %1392 = vmatpush1.bf16.msra.mxu0 %v713
        %1393 = vmatprep.subr.bf16.mxu0 0
        %1394 = vmatpush1.bf16.msra.mxu0 0
        %1395 = vmatprep.subr.bf16.mxu0 0
        %1396 = vmatpush1.bf16.msra.mxu0 0
        %1397 = vmatprep.subr.bf16.mxu0 0
        %1398 = vmatpush1.bf16.msra.mxu0 0
        %1399 = vmatprep.subr.bf16.mxu0 0
        %1400 = vmatpush1.bf16.msra.mxu0 0
        %1401 = vmatprep.subr.bf16.mxu0 0
        %1402 = vmatpush1.bf16.msra.mxu0 0
        %1403 = vmatprep.subr.bf16.mxu0 0
        %1404 = vmatpush1.bf16.msra.mxu0 0
        %1405 = vmatprep.subr.bf16.mxu0 0
        %1406 = vmatpush1.bf16.msra.mxu0 0
        %1407 = vmatprep.subr.bf16.mxu0 0
        %1408 = vmatpush1.bf16.msra.mxu0 0
        %1409 = vmatprep.mubr.bf16.mxu0 0
        %1410 = vmatmul.mubr.bf16.gmra.mrb[0].mxu0 %v240
        %v1411 = vpop.f32.mrb[0].mxu0
        %v1412 = vadd.f32 0.0, %v1411
        %v1413 = vpop.f32.mrb[0].mxu0
        %v1414 = vadd.f32 0.0, %v1413
        %v1415 = vpop.f32.mrb[0].mxu0
        %v1416 = vpop.f32.mrb[0].mxu0
        %1417 = vdwg.mxu0
        %1418 = vmatprep.subr.bf16.mxu0 %v436
        %1419 = vmatpush1.bf16.msra.mxu0 %v435
        %1420 = vmatprep.subr.bf16.mxu0 %v476
        %1421 = vmatpush1.bf16.msra.mxu0 %v475
        %1422 = vmatprep.subr.bf16.mxu0 %v516
        %1423 = vmatpush1.bf16.msra.mxu0 %v515
        %1424 = vmatprep.subr.bf16.mxu0 %v556
        %1425 = vmatpush1.bf16.msra.mxu0 %v555
        %1426 = vmatprep.subr.bf16.mxu0 %v596
        %1427 = vmatpush1.bf16.msra.mxu0 %v595
        %1428 = vmatprep.subr.bf16.mxu0 %v636
        %1429 = vmatpush1.bf16.msra.mxu0 %v635
        %1430 = vmatprep.subr.bf16.mxu0 %v676
        %1431 = vmatpush1.bf16.msra.mxu0 %v675
        %1432 = vmatprep.subr.bf16.mxu0 %v716
        %1433 = vmatpush1.bf16.msra.mxu0 %v715
        %1434 = vmatprep.subr.bf16.mxu0 0
        %1435 = vmatpush1.bf16.msra.mxu0 0
        %1436 = vmatprep.subr.bf16.mxu0 0
        %1437 = vmatpush1.bf16.msra.mxu0 0
        %1438 = vmatprep.subr.bf16.mxu0 0
        %1439 = vmatpush1.bf16.msra.mxu0 0
        %1440 = vmatprep.subr.bf16.mxu0 0
        %1441 = vmatpush1.bf16.msra.mxu0 0
        %1442 = vmatprep.subr.bf16.mxu0 0
        %1443 = vmatpush1.bf16.msra.mxu0 0
        %1444 = vmatprep.subr.bf16.mxu0 0
        %1445 = vmatpush1.bf16.msra.mxu0 0
        %1446 = vmatprep.subr.bf16.mxu0 0
        %1447 = vmatpush1.bf16.msra.mxu0 0
        %1448 = vmatprep.subr.bf16.mxu0 0
        %1449 = vmatpush1.bf16.msra.mxu0 0
        %1450 = vmatprep.mubr.bf16.mxu0 0
        %1451 = vmatmul.mubr.bf16.gmra.mrb[0].mxu0 %v240
        %v1452 = vpop.f32.mrb[0].mxu0
        %v1453 = vadd.f32 0.0, %v1452
        %v1454 = vpop.f32.mrb[0].mxu0
        %v1455 = vadd.f32 0.0, %v1454
        %v1456 = vpop.f32.mrb[0].mxu0
        %v1457 = vpop.f32.mrb[0].mxu0
        %1458 = vdwg.mxu0
        %1459 = vmatprep.subr.bf16.mxu0 %v438
        %1460 = vmatpush1.bf16.msra.mxu0 %v437
        %1461 = vmatprep.subr.bf16.mxu0 %v478
        %1462 = vmatpush1.bf16.msra.mxu0 %v477
        %1463 = vmatprep.subr.bf16.mxu0 %v518
        %1464 = vmatpush1.bf16.msra.mxu0 %v517
        %1465 = vmatprep.subr.bf16.mxu0 %v558
        %1466 = vmatpush1.bf16.msra.mxu0 %v557
        %1467 = vmatprep.subr.bf16.mxu0 %v598
        %1468 = vmatpush1.bf16.msra.mxu0 %v597
        %1469 = vmatprep.subr.bf16.mxu0 %v638
        %1470 = vmatpush1.bf16.msra.mxu0 %v637
        %1471 = vmatprep.subr.bf16.mxu0 %v678
        %1472 = vmatpush1.bf16.msra.mxu0 %v677
        %1473 = vmatprep.subr.bf16.mxu0 %v718
        %1474 = vmatpush1.bf16.msra.mxu0 %v717
        %1475 = vmatprep.subr.bf16.mxu0 0
        %1476 = vmatpush1.bf16.msra.mxu0 0
        %1477 = vmatprep.subr.bf16.mxu0 0
        %1478 = vmatpush1.bf16.msra.mxu0 0
        %1479 = vmatprep.subr.bf16.mxu0 0
        %1480 = vmatpush1.bf16.msra.mxu0 0
        %1481 = vmatprep.subr.bf16.mxu0 0
        %1482 = vmatpush1.bf16.msra.mxu0 0
        %1483 = vmatprep.subr.bf16.mxu0 0
        %1484 = vmatpush1.bf16.msra.mxu0 0
        %1485 = vmatprep.subr.bf16.mxu0 0
        %1486 = vmatpush1.bf16.msra.mxu0 0
        %1487 = vmatprep.subr.bf16.mxu0 0
        %1488 = vmatpush1.bf16.msra.mxu0 0
        %1489 = vmatprep.subr.bf16.mxu0 0
        %1490 = vmatpush1.bf16.msra.mxu0 0
        %1491 = vmatprep.mubr.bf16.mxu0 0
        %1492 = vmatmul.mubr.bf16.gmra.mrb[0].mxu0 %v240
        %v1493 = vpop.f32.mrb[0].mxu0
        %v1494 = vadd.f32 0.0, %v1493
        %v1495 = vpop.f32.mrb[0].mxu0
        %v1496 = vadd.f32 0.0, %v1495
        %v1497 = vpop.f32.mrb[0].mxu0
        %v1498 = vpop.f32.mrb[0].mxu0
        %1499 = vdwg.mxu0
        %1500 = vmatprep.subr.bf16.mxu0 %v440
        %1501 = vmatpush1.bf16.msra.mxu0 %v439
        %1502 = vmatprep.subr.bf16.mxu0 %v480
        %1503 = vmatpush1.bf16.msra.mxu0 %v479
        %1504 = vmatprep.subr.bf16.mxu0 %v520
        %1505 = vmatpush1.bf16.msra.mxu0 %v519
        %1506 = vmatprep.subr.bf16.mxu0 %v560
        %1507 = vmatpush1.bf16.msra.mxu0 %v559
        %1508 = vmatprep.subr.bf16.mxu0 %v600
        %1509 = vmatpush1.bf16.msra.mxu0 %v599
        %1510 = vmatprep.subr.bf16.mxu0 %v640
        %1511 = vmatpush1.bf16.msra.mxu0 %v639
        %1512 = vmatprep.subr.bf16.mxu0 %v680
        %1513 = vmatpush1.bf16.msra.mxu0 %v679
        %1514 = vmatprep.subr.bf16.mxu0 %v720
        %1515 = vmatpush1.bf16.msra.mxu0 %v719
        %1516 = vmatprep.subr.bf16.mxu0 0
        %1517 = vmatpush1.bf16.msra.mxu0 0
        %1518 = vmatprep.subr.bf16.mxu0 0
        %1519 = vmatpush1.bf16.msra.mxu0 0
        %1520 = vmatprep.subr.bf16.mxu0 0
        %1521 = vmatpush1.bf16.msra.mxu0 0
        %1522 = vmatprep.subr.bf16.mxu0 0
        %1523 = vmatpush1.bf16.msra.mxu0 0
        %1524 = vmatprep.subr.bf16.mxu0 0
        %1525 = vmatpush1.bf16.msra.mxu0 0
        %1526 = vmatprep.subr.bf16.mxu0 0
        %1527 = vmatpush1.bf16.msra.mxu0 0
        %1528 = vmatprep.subr.bf16.mxu0 0
        %1529 = vmatpush1.bf16.msra.mxu0 0
        %1530 = vmatprep.subr.bf16.mxu0 0
        %1531 = vmatpush1.bf16.msra.mxu0 0
        %1532 = vmatprep.mubr.bf16.mxu0 0
        %1533 = vmatmul.mubr.bf16.gmra.mrb[0].mxu0 %v240
        %v1534 = vpop.f32.mrb[0].mxu0
        %v1535 = vadd.f32 0.0, %v1534
        %v1536 = vpop.f32.mrb[0].mxu0
        %v1537 = vadd.f32 0.0, %v1536
        %v1538 = vpop.f32.mrb[0].mxu0
        %v1539 = vpop.f32.mrb[0].mxu0
        %1540 = vdwg.mxu0
        %v1541 = vld [vmem:[%s209] ss:$2 sm:$0xff]
        %s1542 = scalar_lea.vmem %s209, 16 [#allocation7]
        %v1543 = vld [vmem:[%s1542] ss:$2 sm:$0xff]
        %s1544 = scalar_lea.vmem %s209, 32 [#allocation7]
        %v1545 = vld [vmem:[%s1544] ss:$2 sm:$0xff]
        %s1546 = scalar_lea.vmem %s209, 48 [#allocation7]
        %v1547 = vld [vmem:[%s1546] ss:$2 sm:$0xff]
        %s1548 = scalar_lea.vmem %s209, 64 [#allocation7]
        %v1549 = vld [vmem:[%s1548] ss:$2 sm:$0xff]
        %v1555 = vlaneseq
        %v1556 = vshrl.u32 %v1555, 7
        %v1557 = vsub.s32 0, %v1556
        %v1558 = vrot.slane %v1541, %v1557
        %v1559 = vlaneseq
        %v1560 = vshrl.u32 %v1559, 7
        %v1561 = vsub.s32 1, %v1560
        %v1562 = vrot.slane %v1541, %v1561
        %v1563 = vlaneseq
        %v1564 = vshrl.u32 %v1563, 7
        %v1565 = vsub.s32 2, %v1564
        %v1566 = vrot.slane %v1541, %v1565
        %v1567 = vlaneseq
        %v1568 = vshrl.u32 %v1567, 7
        %v1569 = vsub.s32 3, %v1568
        %v1570 = vrot.slane %v1541, %v1569
        %v1571 = vlaneseq
        %v1572 = vshrl.u32 %v1571, 7
        %v1573 = vsub.s32 4, %v1572
        %v1574 = vrot.slane %v1541, %v1573
        %v1575 = vlaneseq
        %v1576 = vshrl.u32 %v1575, 7
        %v1577 = vsub.s32 5, %v1576
        %v1578 = vrot.slane %v1541, %v1577
        %v1579 = vlaneseq
        %v1580 = vshrl.u32 %v1579, 7
        %v1581 = vsub.s32 6, %v1580
        %v1582 = vrot.slane %v1541, %v1581
        %v1583 = vlaneseq
        %v1584 = vshrl.u32 %v1583, 7
        %v1585 = vsub.s32 7, %v1584
        %v1586 = vrot.slane %v1541, %v1585
        %v1587 = vlaneseq
        %v1588 = vshrl.u32 %v1587, 7
        %v1589 = vsub.s32 0, %v1588
        %v1590 = vrot.slane %v1543, %v1589
        %v1591 = vlaneseq
        %v1592 = vshrl.u32 %v1591, 7
        %v1593 = vsub.s32 1, %v1592
        %v1594 = vrot.slane %v1543, %v1593
        %v1595 = vlaneseq
        %v1596 = vshrl.u32 %v1595, 7
        %v1597 = vsub.s32 2, %v1596
        %v1598 = vrot.slane %v1543, %v1597
        %v1599 = vlaneseq
        %v1600 = vshrl.u32 %v1599, 7
        %v1601 = vsub.s32 3, %v1600
        %v1602 = vrot.slane %v1543, %v1601
        %v1603 = vlaneseq
        %v1604 = vshrl.u32 %v1603, 7
        %v1605 = vsub.s32 4, %v1604
        %v1606 = vrot.slane %v1543, %v1605
        %v1607 = vlaneseq
        %v1608 = vshrl.u32 %v1607, 7
        %v1609 = vsub.s32 5, %v1608
        %v1610 = vrot.slane %v1543, %v1609
        %v1611 = vlaneseq
        %v1612 = vshrl.u32 %v1611, 7
        %v1613 = vsub.s32 6, %v1612
        %v1614 = vrot.slane %v1543, %v1613
        %v1615 = vlaneseq
        %v1616 = vshrl.u32 %v1615, 7
        %v1617 = vsub.s32 7, %v1616
        %v1618 = vrot.slane %v1543, %v1617
        %v1619 = vlaneseq
        %v1620 = vshrl.u32 %v1619, 7
        %v1621 = vsub.s32 0, %v1620
        %v1622 = vrot.slane %v1545, %v1621
        %v1623 = vlaneseq
        %v1624 = vshrl.u32 %v1623, 7
        %v1625 = vsub.s32 1, %v1624
        %v1626 = vrot.slane %v1545, %v1625
        %v1627 = vlaneseq
        %v1628 = vshrl.u32 %v1627, 7
        %v1629 = vsub.s32 2, %v1628
        %v1630 = vrot.slane %v1545, %v1629
        %v1631 = vlaneseq
        %v1632 = vshrl.u32 %v1631, 7
        %v1633 = vsub.s32 3, %v1632
        %v1634 = vrot.slane %v1545, %v1633
        %v1635 = vlaneseq
        %v1636 = vshrl.u32 %v1635, 7
        %v1637 = vsub.s32 4, %v1636
        %v1638 = vrot.slane %v1545, %v1637
        %v1639 = vlaneseq
        %v1640 = vshrl.u32 %v1639, 7
        %v1641 = vsub.s32 5, %v1640
        %v1642 = vrot.slane %v1545, %v1641
        %v1643 = vlaneseq
        %v1644 = vshrl.u32 %v1643, 7
        %v1645 = vsub.s32 6, %v1644
        %v1646 = vrot.slane %v1545, %v1645
        %v1647 = vlaneseq
        %v1648 = vshrl.u32 %v1647, 7
        %v1649 = vsub.s32 7, %v1648
        %v1650 = vrot.slane %v1545, %v1649
        %v1651 = vlaneseq
        %v1652 = vshrl.u32 %v1651, 7
        %v1653 = vsub.s32 0, %v1652
        %v1654 = vrot.slane %v1547, %v1653
        %v1655 = vlaneseq
        %v1656 = vshrl.u32 %v1655, 7
        %v1657 = vsub.s32 1, %v1656
        %v1658 = vrot.slane %v1547, %v1657
        %v1659 = vlaneseq
        %v1660 = vshrl.u32 %v1659, 7
        %v1661 = vsub.s32 2, %v1660
        %v1662 = vrot.slane %v1547, %v1661
        %v1663 = vlaneseq
        %v1664 = vshrl.u32 %v1663, 7
        %v1665 = vsub.s32 3, %v1664
        %v1666 = vrot.slane %v1547, %v1665
        %v1667 = vlaneseq
        %v1668 = vshrl.u32 %v1667, 7
        %v1669 = vsub.s32 4, %v1668
        %v1670 = vrot.slane %v1547, %v1669
        %v1671 = vlaneseq
        %v1672 = vshrl.u32 %v1671, 7
        %v1673 = vsub.s32 5, %v1672
        %v1674 = vrot.slane %v1547, %v1673
        %v1675 = vlaneseq
        %v1676 = vshrl.u32 %v1675, 7
        %v1677 = vsub.s32 6, %v1676
        %v1678 = vrot.slane %v1547, %v1677
        %v1679 = vlaneseq
        %v1680 = vshrl.u32 %v1679, 7
        %v1681 = vsub.s32 7, %v1680
        %v1682 = vrot.slane %v1547, %v1681
        %v1683 = vlaneseq
        %v1684 = vshrl.u32 %v1683, 7
        %v1685 = vsub.s32 0, %v1684
        %v1686 = vrot.slane %v1549, %v1685
        %v1687 = vlaneseq
        %v1688 = vshrl.u32 %v1687, 7
        %v1689 = vsub.s32 1, %v1688
        %v1690 = vrot.slane %v1549, %v1689
        %v1691 = vlaneseq
        %v1692 = vshrl.u32 %v1691, 7
        %v1693 = vsub.s32 2, %v1692
        %v1694 = vrot.slane %v1549, %v1693
        %v1695 = vlaneseq
        %v1696 = vshrl.u32 %v1695, 7
        %v1697 = vsub.s32 3, %v1696
        %v1698 = vrot.slane %v1549, %v1697
        %v1699 = vlaneseq
        %v1700 = vshrl.u32 %v1699, 7
        %v1701 = vsub.s32 4, %v1700
        %v1702 = vrot.slane %v1549, %v1701
        %v1703 = vlaneseq
        %v1704 = vshrl.u32 %v1703, 7
        %v1705 = vsub.s32 5, %v1704
        %v1706 = vrot.slane %v1549, %v1705
        %v1707 = vlaneseq
        %v1708 = vshrl.u32 %v1707, 7
        %v1709 = vsub.s32 6, %v1708
        %v1710 = vrot.slane %v1549, %v1709
        %v1711 = vlaneseq
        %v1712 = vshrl.u32 %v1711, 7
        %v1713 = vsub.s32 7, %v1712
        %v1714 = vrot.slane %v1549, %v1713
        %v1755 = vmul.f32 %v756, %v1558
        %v1756 = vmul.f32 %v758, %v1562
        %v1757 = vmul.f32 %v797, %v1566
        %v1758 = vmul.f32 %v799, %v1570
        %v1759 = vmul.f32 %v838, %v1574
        %v1760 = vmul.f32 %v840, %v1578
        %v1761 = vmul.f32 %v879, %v1582
        %v1762 = vmul.f32 %v881, %v1586
        %v1763 = vmul.f32 %v920, %v1590
        %v1764 = vmul.f32 %v922, %v1594
        %v1765 = vmul.f32 %v961, %v1598
        %v1766 = vmul.f32 %v963, %v1602
        %v1767 = vmul.f32 %v1002, %v1606
        %v1768 = vmul.f32 %v1004, %v1610
        %v1769 = vmul.f32 %v1043, %v1614
        %v1770 = vmul.f32 %v1045, %v1618
        %v1771 = vmul.f32 %v1084, %v1622
        %v1772 = vmul.f32 %v1086, %v1626
        %v1773 = vmul.f32 %v1125, %v1630
        %v1774 = vmul.f32 %v1127, %v1634
        %v1775 = vmul.f32 %v1166, %v1638
        %v1776 = vmul.f32 %v1168, %v1642
        %v1777 = vmul.f32 %v1207, %v1646
        %v1778 = vmul.f32 %v1209, %v1650
        %v1779 = vmul.f32 %v1248, %v1654
        %v1780 = vmul.f32 %v1250, %v1658
        %v1781 = vmul.f32 %v1289, %v1662
        %v1782 = vmul.f32 %v1291, %v1666
        %v1783 = vmul.f32 %v1330, %v1670
        %v1784 = vmul.f32 %v1332, %v1674
        %v1785 = vmul.f32 %v1371, %v1678
        %v1786 = vmul.f32 %v1373, %v1682
        %v1787 = vmul.f32 %v1412, %v1686
        %v1788 = vmul.f32 %v1414, %v1690
        %v1789 = vmul.f32 %v1453, %v1694
        %v1790 = vmul.f32 %v1455, %v1698
        %v1791 = vmul.f32 %v1494, %v1702
        %v1792 = vmul.f32 %v1496, %v1706
        %v1793 = vmul.f32 %v1535, %v1710
        %v1794 = vmul.f32 %v1537, %v1714
        %s1795 = scalar_lea.vmem %s209, 1 [#allocation7]
        %v1796 = vld [vmem:[%s1795] ss:$2 sm:$0xff]
        %s1797 = scalar_lea.vmem %s209, 17 [#allocation7]
        %v1798 = vld [vmem:[%s1797] ss:$2 sm:$0xff]
        %s1799 = scalar_lea.vmem %s209, 33 [#allocation7]
        %v1800 = vld [vmem:[%s1799] ss:$2 sm:$0xff]
        %s1801 = scalar_lea.vmem %s209, 49 [#allocation7]
        %v1802 = vld [vmem:[%s1801] ss:$2 sm:$0xff]
        %s1803 = scalar_lea.vmem %s209, 65 [#allocation7]
        %v1804 = vld [vmem:[%s1803] ss:$2 sm:$0xff]
        %v1810 = vlaneseq
        %v1811 = vshrl.u32 %v1810, 7
        %v1812 = vsub.s32 0, %v1811
        %v1813 = vrot.slane %v1796, %v1812
        %v1814 = vlaneseq
        %v1815 = vshrl.u32 %v1814, 7
        %v1816 = vsub.s32 1, %v1815
        %v1817 = vrot.slane %v1796, %v1816
        %v1818 = vlaneseq
        %v1819 = vshrl.u32 %v1818, 7
        %v1820 = vsub.s32 2, %v1819
        %v1821 = vrot.slane %v1796, %v1820
        %v1822 = vlaneseq
        %v1823 = vshrl.u32 %v1822, 7
        %v1824 = vsub.s32 3, %v1823
        %v1825 = vrot.slane %v1796, %v1824
        %v1826 = vlaneseq
        %v1827 = vshrl.u32 %v1826, 7
        %v1828 = vsub.s32 4, %v1827
        %v1829 = vrot.slane %v1796, %v1828
        %v1830 = vlaneseq
        %v1831 = vshrl.u32 %v1830, 7
        %v1832 = vsub.s32 5, %v1831
        %v1833 = vrot.slane %v1796, %v1832
        %v1834 = vlaneseq
        %v1835 = vshrl.u32 %v1834, 7
        %v1836 = vsub.s32 6, %v1835
        %v1837 = vrot.slane %v1796, %v1836
        %v1838 = vlaneseq
        %v1839 = vshrl.u32 %v1838, 7
        %v1840 = vsub.s32 7, %v1839
        %v1841 = vrot.slane %v1796, %v1840
        %v1842 = vlaneseq
        %v1843 = vshrl.u32 %v1842, 7
        %v1844 = vsub.s32 0, %v1843
        %v1845 = vrot.slane %v1798, %v1844
        %v1846 = vlaneseq
        %v1847 = vshrl.u32 %v1846, 7
        %v1848 = vsub.s32 1, %v1847
        %v1849 = vrot.slane %v1798, %v1848
        %v1850 = vlaneseq
        %v1851 = vshrl.u32 %v1850, 7
        %v1852 = vsub.s32 2, %v1851
        %v1853 = vrot.slane %v1798, %v1852
        %v1854 = vlaneseq
        %v1855 = vshrl.u32 %v1854, 7
        %v1856 = vsub.s32 3, %v1855
        %v1857 = vrot.slane %v1798, %v1856
        %v1858 = vlaneseq
        %v1859 = vshrl.u32 %v1858, 7
        %v1860 = vsub.s32 4, %v1859
        %v1861 = vrot.slane %v1798, %v1860
        %v1862 = vlaneseq
        %v1863 = vshrl.u32 %v1862, 7
        %v1864 = vsub.s32 5, %v1863
        %v1865 = vrot.slane %v1798, %v1864
        %v1866 = vlaneseq
        %v1867 = vshrl.u32 %v1866, 7
        %v1868 = vsub.s32 6, %v1867
        %v1869 = vrot.slane %v1798, %v1868
        %v1870 = vlaneseq
        %v1871 = vshrl.u32 %v1870, 7
        %v1872 = vsub.s32 7, %v1871
        %v1873 = vrot.slane %v1798, %v1872
        %v1874 = vlaneseq
        %v1875 = vshrl.u32 %v1874, 7
        %v1876 = vsub.s32 0, %v1875
        %v1877 = vrot.slane %v1800, %v1876
        %v1878 = vlaneseq
        %v1879 = vshrl.u32 %v1878, 7
        %v1880 = vsub.s32 1, %v1879
        %v1881 = vrot.slane %v1800, %v1880
        %v1882 = vlaneseq
        %v1883 = vshrl.u32 %v1882, 7
        %v1884 = vsub.s32 2, %v1883
        %v1885 = vrot.slane %v1800, %v1884
        %v1886 = vlaneseq
        %v1887 = vshrl.u32 %v1886, 7
        %v1888 = vsub.s32 3, %v1887
        %v1889 = vrot.slane %v1800, %v1888
        %v1890 = vlaneseq
        %v1891 = vshrl.u32 %v1890, 7
        %v1892 = vsub.s32 4, %v1891
        %v1893 = vrot.slane %v1800, %v1892
        %v1894 = vlaneseq
        %v1895 = vshrl.u32 %v1894, 7
        %v1896 = vsub.s32 5, %v1895
        %v1897 = vrot.slane %v1800, %v1896
        %v1898 = vlaneseq
        %v1899 = vshrl.u32 %v1898, 7
        %v1900 = vsub.s32 6, %v1899
        %v1901 = vrot.slane %v1800, %v1900
        %v1902 = vlaneseq
        %v1903 = vshrl.u32 %v1902, 7
        %v1904 = vsub.s32 7, %v1903
        %v1905 = vrot.slane %v1800, %v1904
        %v1906 = vlaneseq
        %v1907 = vshrl.u32 %v1906, 7
        %v1908 = vsub.s32 0, %v1907
        %v1909 = vrot.slane %v1802, %v1908
        %v1910 = vlaneseq
        %v1911 = vshrl.u32 %v1910, 7
        %v1912 = vsub.s32 1, %v1911
        %v1913 = vrot.slane %v1802, %v1912
        %v1914 = vlaneseq
        %v1915 = vshrl.u32 %v1914, 7
        %v1916 = vsub.s32 2, %v1915
        %v1917 = vrot.slane %v1802, %v1916
        %v1918 = vlaneseq
        %v1919 = vshrl.u32 %v1918, 7
        %v1920 = vsub.s32 3, %v1919
        %v1921 = vrot.slane %v1802, %v1920
        %v1922 = vlaneseq
        %v1923 = vshrl.u32 %v1922, 7
        %v1924 = vsub.s32 4, %v1923
        %v1925 = vrot.slane %v1802, %v1924
        %v1926 = vlaneseq
        %v1927 = vshrl.u32 %v1926, 7
        %v1928 = vsub.s32 5, %v1927
        %v1929 = vrot.slane %v1802, %v1928
        %v1930 = vlaneseq
        %v1931 = vshrl.u32 %v1930, 7
        %v1932 = vsub.s32 6, %v1931
        %v1933 = vrot.slane %v1802, %v1932
        %v1934 = vlaneseq
        %v1935 = vshrl.u32 %v1934, 7
        %v1936 = vsub.s32 7, %v1935
        %v1937 = vrot.slane %v1802, %v1936
        %v1938 = vlaneseq
        %v1939 = vshrl.u32 %v1938, 7
        %v1940 = vsub.s32 0, %v1939
        %v1941 = vrot.slane %v1804, %v1940
        %v1942 = vlaneseq
        %v1943 = vshrl.u32 %v1942, 7
        %v1944 = vsub.s32 1, %v1943
        %v1945 = vrot.slane %v1804, %v1944
        %v1946 = vlaneseq
        %v1947 = vshrl.u32 %v1946, 7
        %v1948 = vsub.s32 2, %v1947
        %v1949 = vrot.slane %v1804, %v1948
        %v1950 = vlaneseq
        %v1951 = vshrl.u32 %v1950, 7
        %v1952 = vsub.s32 3, %v1951
        %v1953 = vrot.slane %v1804, %v1952
        %v1954 = vlaneseq
        %v1955 = vshrl.u32 %v1954, 7
        %v1956 = vsub.s32 4, %v1955
        %v1957 = vrot.slane %v1804, %v1956
        %v1958 = vlaneseq
        %v1959 = vshrl.u32 %v1958, 7
        %v1960 = vsub.s32 5, %v1959
        %v1961 = vrot.slane %v1804, %v1960
        %v1962 = vlaneseq
        %v1963 = vshrl.u32 %v1962, 7
        %v1964 = vsub.s32 6, %v1963
        %v1965 = vrot.slane %v1804, %v1964
        %v1966 = vlaneseq
        %v1967 = vshrl.u32 %v1966, 7
        %v1968 = vsub.s32 7, %v1967
        %v1969 = vrot.slane %v1804, %v1968
        %v2010 = vadd.f32 %v1755, %v1813
        %v2011 = vadd.f32 %v1756, %v1817
        %v2012 = vadd.f32 %v1757, %v1821
        %v2013 = vadd.f32 %v1758, %v1825
        %v2014 = vadd.f32 %v1759, %v1829
        %v2015 = vadd.f32 %v1760, %v1833
        %v2016 = vadd.f32 %v1761, %v1837
        %v2017 = vadd.f32 %v1762, %v1841
        %v2018 = vadd.f32 %v1763, %v1845
        %v2019 = vadd.f32 %v1764, %v1849
        %v2020 = vadd.f32 %v1765, %v1853
        %v2021 = vadd.f32 %v1766, %v1857
        %v2022 = vadd.f32 %v1767, %v1861
        %v2023 = vadd.f32 %v1768, %v1865
        %v2024 = vadd.f32 %v1769, %v1869
        %v2025 = vadd.f32 %v1770, %v1873
        %v2026 = vadd.f32 %v1771, %v1877
        %v2027 = vadd.f32 %v1772, %v1881
        %v2028 = vadd.f32 %v1773, %v1885
        %v2029 = vadd.f32 %v1774, %v1889
        %v2030 = vadd.f32 %v1775, %v1893
        %v2031 = vadd.f32 %v1776, %v1897
        %v2032 = vadd.f32 %v1777, %v1901
        %v2033 = vadd.f32 %v1778, %v1905
        %v2034 = vadd.f32 %v1779, %v1909
        %v2035 = vadd.f32 %v1780, %v1913
        %v2036 = vadd.f32 %v1781, %v1917
        %v2037 = vadd.f32 %v1782, %v1921
        %v2038 = vadd.f32 %v1783, %v1925
        %v2039 = vadd.f32 %v1784, %v1929
        %v2040 = vadd.f32 %v1785, %v1933
        %v2041 = vadd.f32 %v1786, %v1937
        %v2042 = vadd.f32 %v1787, %v1941
        %v2043 = vadd.f32 %v1788, %v1945
        %v2044 = vadd.f32 %v1789, %v1949
        %v2045 = vadd.f32 %v1790, %v1953
        %v2046 = vadd.f32 %v1791, %v1957
        %v2047 = vadd.f32 %v1792, %v1961
        %v2048 = vadd.f32 %v1793, %v1965
        %v2049 = vadd.f32 %v1794, %v1969
        %vm2050 = vcmp.ge.f32.partialorder %v2010, 0.0
        %vm2051 = vcmp.ge.f32.partialorder %v2011, 0.0
        %vm2052 = vcmp.ge.f32.partialorder %v2012, 0.0
        %vm2053 = vcmp.ge.f32.partialorder %v2013, 0.0
        %vm2054 = vcmp.ge.f32.partialorder %v2014, 0.0
        %vm2055 = vcmp.ge.f32.partialorder %v2015, 0.0
        %vm2056 = vcmp.ge.f32.partialorder %v2016, 0.0
        %vm2057 = vcmp.ge.f32.partialorder %v2017, 0.0
        %vm2058 = vcmp.ge.f32.partialorder %v2018, 0.0
        %vm2059 = vcmp.ge.f32.partialorder %v2019, 0.0
        %vm2060 = vcmp.ge.f32.partialorder %v2020, 0.0
        %vm2061 = vcmp.ge.f32.partialorder %v2021, 0.0
        %vm2062 = vcmp.ge.f32.partialorder %v2022, 0.0
        %vm2063 = vcmp.ge.f32.partialorder %v2023, 0.0
        %vm2064 = vcmp.ge.f32.partialorder %v2024, 0.0
        %vm2065 = vcmp.ge.f32.partialorder %v2025, 0.0
        %vm2066 = vcmp.ge.f32.partialorder %v2026, 0.0
        %vm2067 = vcmp.ge.f32.partialorder %v2027, 0.0
        %vm2068 = vcmp.ge.f32.partialorder %v2028, 0.0
        %vm2069 = vcmp.ge.f32.partialorder %v2029, 0.0
        %vm2070 = vcmp.ge.f32.partialorder %v2030, 0.0
        %vm2071 = vcmp.ge.f32.partialorder %v2031, 0.0
        %vm2072 = vcmp.ge.f32.partialorder %v2032, 0.0
        %vm2073 = vcmp.ge.f32.partialorder %v2033, 0.0
        %vm2074 = vcmp.ge.f32.partialorder %v2034, 0.0
        %vm2075 = vcmp.ge.f32.partialorder %v2035, 0.0
        %vm2076 = vcmp.ge.f32.partialorder %v2036, 0.0
        %vm2077 = vcmp.ge.f32.partialorder %v2037, 0.0
        %vm2078 = vcmp.ge.f32.partialorder %v2038, 0.0
        %vm2079 = vcmp.ge.f32.partialorder %v2039, 0.0
        %vm2080 = vcmp.ge.f32.partialorder %v2040, 0.0
        %vm2081 = vcmp.ge.f32.partialorder %v2041, 0.0
        %vm2082 = vcmp.ge.f32.partialorder %v2042, 0.0
        %vm2083 = vcmp.ge.f32.partialorder %v2043, 0.0
        %vm2084 = vcmp.ge.f32.partialorder %v2044, 0.0
        %vm2085 = vcmp.ge.f32.partialorder %v2045, 0.0
        %vm2086 = vcmp.ge.f32.partialorder %v2046, 0.0
        %vm2087 = vcmp.ge.f32.partialorder %v2047, 0.0
        %vm2088 = vcmp.ge.f32.partialorder %v2048, 0.0
        %vm2089 = vcmp.ge.f32.partialorder %v2049, 0.0
        %v2090 = vmul.f32 %v2010, 0.01
        %v2091 = vmul.f32 %v2011, 0.01
        %v2092 = vmul.f32 %v2012, 0.01
        %v2093 = vmul.f32 %v2013, 0.01
        %v2094 = vmul.f32 %v2014, 0.01
        %v2095 = vmul.f32 %v2015, 0.01
        %v2096 = vmul.f32 %v2016, 0.01
        %v2097 = vmul.f32 %v2017, 0.01
        %v2098 = vmul.f32 %v2018, 0.01
        %v2099 = vmul.f32 %v2019, 0.01
        %v2100 = vmul.f32 %v2020, 0.01
        %v2101 = vmul.f32 %v2021, 0.01
        %v2102 = vmul.f32 %v2022, 0.01
        %v2103 = vmul.f32 %v2023, 0.01
        %v2104 = vmul.f32 %v2024, 0.01
        %v2105 = vmul.f32 %v2025, 0.01
        %v2106 = vmul.f32 %v2026, 0.01
        %v2107 = vmul.f32 %v2027, 0.01
        %v2108 = vmul.f32 %v2028, 0.01
        %v2109 = vmul.f32 %v2029, 0.01
        %v2110 = vmul.f32 %v2030, 0.01
        %v2111 = vmul.f32 %v2031, 0.01
        %v2112 = vmul.f32 %v2032, 0.01
        %v2113 = vmul.f32 %v2033, 0.01
        %v2114 = vmul.f32 %v2034, 0.01
        %v2115 = vmul.f32 %v2035, 0.01
        %v2116 = vmul.f32 %v2036, 0.01
        %v2117 = vmul.f32 %v2037, 0.01
        %v2118 = vmul.f32 %v2038, 0.01
        %v2119 = vmul.f32 %v2039, 0.01
        %v2120 = vmul.f32 %v2040, 0.01
        %v2121 = vmul.f32 %v2041, 0.01
        %v2122 = vmul.f32 %v2042, 0.01
        %v2123 = vmul.f32 %v2043, 0.01
        %v2124 = vmul.f32 %v2044, 0.01
        %v2125 = vmul.f32 %v2045, 0.01
        %v2126 = vmul.f32 %v2046, 0.01
        %v2127 = vmul.f32 %v2047, 0.01
        %v2128 = vmul.f32 %v2048, 0.01
        %v2129 = vmul.f32 %v2049, 0.01
        %v2130 = vsel %vm2050, %v2010, %v2090
        %v2131 = vsel %vm2051, %v2011, %v2091
        %v2132 = vsel %vm2052, %v2012, %v2092
        %v2133 = vsel %vm2053, %v2013, %v2093
        %v2134 = vsel %vm2054, %v2014, %v2094
        %v2135 = vsel %vm2055, %v2015, %v2095
        %v2136 = vsel %vm2056, %v2016, %v2096
        %v2137 = vsel %vm2057, %v2017, %v2097
        %v2138 = vsel %vm2058, %v2018, %v2098
        %v2139 = vsel %vm2059, %v2019, %v2099
        %v2140 = vsel %vm2060, %v2020, %v2100
        %v2141 = vsel %vm2061, %v2021, %v2101
        %v2142 = vsel %vm2062, %v2022, %v2102
        %v2143 = vsel %vm2063, %v2023, %v2103
        %v2144 = vsel %vm2064, %v2024, %v2104
        %v2145 = vsel %vm2065, %v2025, %v2105
        %v2146 = vsel %vm2066, %v2026, %v2106
        %v2147 = vsel %vm2067, %v2027, %v2107
        %v2148 = vsel %vm2068, %v2028, %v2108
        %v2149 = vsel %vm2069, %v2029, %v2109
        %v2150 = vsel %vm2070, %v2030, %v2110
        %v2151 = vsel %vm2071, %v2031, %v2111
        %v2152 = vsel %vm2072, %v2032, %v2112
        %v2153 = vsel %vm2073, %v2033, %v2113
        %v2154 = vsel %vm2074, %v2034, %v2114
        %v2155 = vsel %vm2075, %v2035, %v2115
        %v2156 = vsel %vm2076, %v2036, %v2116
        %v2157 = vsel %vm2077, %v2037, %v2117
        %v2158 = vsel %vm2078, %v2038, %v2118
        %v2159 = vsel %vm2079, %v2039, %v2119
        %v2160 = vsel %vm2080, %v2040, %v2120
        %v2161 = vsel %vm2081, %v2041, %v2121
        %v2162 = vsel %vm2082, %v2042, %v2122
        %v2163 = vsel %vm2083, %v2043, %v2123
        %v2164 = vsel %vm2084, %v2044, %v2124
        %v2165 = vsel %vm2085, %v2045, %v2125
        %v2166 = vsel %vm2086, %v2046, %v2126
        %v2167 = vsel %vm2087, %v2047, %v2127
        %v2168 = vsel %vm2088, %v2048, %v2128
        %v2169 = vsel %vm2089, %v2049, %v2129
        %v2170 = vpack.c.bf16 %v2130, %v2130
        %v2171 = vpack.c.bf16 %v2131, %v2131
        %v2172 = vpack.c.bf16 %v2132, %v2132
        %v2173 = vpack.c.bf16 %v2133, %v2133
        %v2174 = vpack.c.bf16 %v2134, %v2134
        %v2175 = vpack.c.bf16 %v2135, %v2135
        %v2176 = vpack.c.bf16 %v2136, %v2136
        %v2177 = vpack.c.bf16 %v2137, %v2137
        %v2178 = vpack.c.bf16 %v2138, %v2138
        %v2179 = vpack.c.bf16 %v2139, %v2139
        %v2180 = vpack.c.bf16 %v2140, %v2140
        %v2181 = vpack.c.bf16 %v2141, %v2141
        %v2182 = vpack.c.bf16 %v2142, %v2142
        %v2183 = vpack.c.bf16 %v2143, %v2143
        %v2184 = vpack.c.bf16 %v2144, %v2144
        %v2185 = vpack.c.bf16 %v2145, %v2145
        %v2186 = vpack.c.bf16 %v2146, %v2146
        %v2187 = vpack.c.bf16 %v2147, %v2147
        %v2188 = vpack.c.bf16 %v2148, %v2148
        %v2189 = vpack.c.bf16 %v2149, %v2149
        %v2190 = vpack.c.bf16 %v2150, %v2150
        %v2191 = vpack.c.bf16 %v2151, %v2151
        %v2192 = vpack.c.bf16 %v2152, %v2152
        %v2193 = vpack.c.bf16 %v2153, %v2153
        %v2194 = vpack.c.bf16 %v2154, %v2154
        %v2195 = vpack.c.bf16 %v2155, %v2155
        %v2196 = vpack.c.bf16 %v2156, %v2156
        %v2197 = vpack.c.bf16 %v2157, %v2157
        %v2198 = vpack.c.bf16 %v2158, %v2158
        %v2199 = vpack.c.bf16 %v2159, %v2159
        %v2200 = vpack.c.bf16 %v2160, %v2160
        %v2201 = vpack.c.bf16 %v2161, %v2161
        %v2202 = vpack.c.bf16 %v2162, %v2162
        %v2203 = vpack.c.bf16 %v2163, %v2163
        %v2204 = vpack.c.bf16 %v2164, %v2164
        %v2205 = vpack.c.bf16 %v2165, %v2165
        %v2206 = vpack.c.bf16 %v2166, %v2166
        %v2207 = vpack.c.bf16 %v2167, %v2167
        %v2208 = vpack.c.bf16 %v2168, %v2168
        %v2209 = vpack.c.bf16 %v2169, %v2169
        %v2250 = vunpack.c.l.b16 %v2170
        %v2251 = vunpack.c.l.b16 %v2171
        %v2252 = vunpack.c.l.b16 %v2172
        %v2253 = vunpack.c.l.b16 %v2173
        %v2254 = vunpack.c.l.b16 %v2174
        %v2255 = vunpack.c.l.b16 %v2175
        %v2256 = vunpack.c.l.b16 %v2176
        %v2257 = vunpack.c.l.b16 %v2177
        %v2258 = vunpack.c.l.b16 %v2178
        %v2259 = vunpack.c.l.b16 %v2179
        %v2260 = vunpack.c.l.b16 %v2180
        %v2261 = vunpack.c.l.b16 %v2181
        %v2262 = vunpack.c.l.b16 %v2182
        %v2263 = vunpack.c.l.b16 %v2183
        %v2264 = vunpack.c.l.b16 %v2184
        %v2265 = vunpack.c.l.b16 %v2185
        %v2266 = vunpack.c.l.b16 %v2186
        %v2267 = vunpack.c.l.b16 %v2187
        %v2268 = vunpack.c.l.b16 %v2188
        %v2269 = vunpack.c.l.b16 %v2189
        %v2270 = vunpack.c.l.b16 %v2190
        %v2271 = vunpack.c.l.b16 %v2191
        %v2272 = vunpack.c.l.b16 %v2192
        %v2273 = vunpack.c.l.b16 %v2193
        %v2274 = vunpack.c.l.b16 %v2194
        %v2275 = vunpack.c.l.b16 %v2195
        %v2276 = vunpack.c.l.b16 %v2196
        %v2277 = vunpack.c.l.b16 %v2197
        %v2278 = vunpack.c.l.b16 %v2198
        %v2279 = vunpack.c.l.b16 %v2199
        %v2280 = vunpack.c.l.b16 %v2200
        %v2281 = vunpack.c.l.b16 %v2201
        %v2282 = vunpack.c.l.b16 %v2202
        %v2283 = vunpack.c.l.b16 %v2203
        %v2284 = vunpack.c.l.b16 %v2204
        %v2285 = vunpack.c.l.b16 %v2205
        %v2286 = vunpack.c.l.b16 %v2206
        %v2287 = vunpack.c.l.b16 %v2207
        %v2288 = vunpack.c.l.b16 %v2208
        %v2289 = vunpack.c.l.b16 %v2209
        %v2290 = vpack.c.b16 %v2251, %v2250
        %v2291 = vpack.c.b16 %v2253, %v2252
        %v2292 = vpack.c.b16 %v2255, %v2254
        %v2293 = vpack.c.b16 %v2257, %v2256
        %v2294 = vpack.c.b16 %v2259, %v2258
        %v2295 = vpack.c.b16 %v2261, %v2260
        %v2296 = vpack.c.b16 %v2263, %v2262
        %v2297 = vpack.c.b16 %v2265, %v2264
        %v2298 = vpack.c.b16 %v2267, %v2266
        %v2299 = vpack.c.b16 %v2269, %v2268
        %v2300 = vpack.c.b16 %v2271, %v2270
        %v2301 = vpack.c.b16 %v2273, %v2272
        %v2302 = vpack.c.b16 %v2275, %v2274
        %v2303 = vpack.c.b16 %v2277, %v2276
        %v2304 = vpack.c.b16 %v2279, %v2278
        %v2305 = vpack.c.b16 %v2281, %v2280
        %v2306 = vpack.c.b16 %v2283, %v2282
        %v2307 = vpack.c.b16 %v2285, %v2284
        %v2308 = vpack.c.b16 %v2287, %v2286
        %v2309 = vpack.c.b16 %v2289, %v2288
        %2330 = vst [vmem:[%s236] sm:$0xff] %v2290
        %2331 = vst [vmem:[%s236 + $0x8] sm:$0xff] %v2291
        %2332 = vst [vmem:[%s236 + $0x10] sm:$0xff] %v2292
        %2333 = vst [vmem:[%s236 + $0x18] sm:$0xff] %v2293
        %2334 = vst [vmem:[%s236 + $0x20] sm:$0xff] %v2294
        %2335 = vst [vmem:[%s236 + $0x28] sm:$0xff] %v2295
        %2336 = vst [vmem:[%s236 + $0x30] sm:$0xff] %v2296
        %2337 = vst [vmem:[%s236 + $0x38] sm:$0xff] %v2297
        %2338 = vst [vmem:[%s236 + $0x40] sm:$0xff] %v2298
        %2339 = vst [vmem:[%s236 + $0x48] sm:$0xff] %v2299
        %2340 = vst [vmem:[%s236 + $0x50] sm:$0xff] %v2300
        %2341 = vst [vmem:[%s236 + $0x58] sm:$0xff] %v2301
        %2342 = vst [vmem:[%s236 + $0x60] sm:$0xff] %v2302
        %2343 = vst [vmem:[%s236 + $0x68] sm:$0xff] %v2303
        %2344 = vst [vmem:[%s236 + $0x70] sm:$0xff] %v2304
        %2345 = vst [vmem:[%s236 + $0x78] sm:$0xff] %v2305
        %2346 = vst [vmem:[%s236 + $0x80] sm:$0xff] %v2306
        %2347 = vst [vmem:[%s236 + $0x88] sm:$0xff] %v2307
        %2348 = vst [vmem:[%s236 + $0x90] sm:$0xff] %v2308
        %2349 = vst [vmem:[%s236 + $0x98] sm:$0xff] %v2309
        %s2350 = sand.u32 %s102, 1
        %s2351 = scalar_lea.sflag [#allocation4], %s2350
        %s2352 = sand.u32 %s102, 1
        %s2353 = smul.addr %s2352, 160
        %s2354 = scalar_lea.vmem [#allocation8], %s2353
        // Predicated region
        $region45: #{tpu_custom_call.1} parent=31 // pred_check
          %p2355 = pneg %p112
        $region46: #{tpu_custom_call.1} parent=31 // pred_check_branch
          %2357 = sbr.rel (%p2355) target = $region48
        $region47: #{tpu_custom_call.1} parent=31 // pred_region
          %s2358 = smul.u32 40, %s21
          %s2360 = ssub.s32 2560, 2560
          %2361 = vsyncadd %s2351, %s2360
          %s2362 = smul.addr %s2358, 64
          %s2363 = scalar_lea.hbm %s3, %s2362
          %s2365 = sshll.u32 %s2354, 4
          %s2366 = int_to_ptr.vmem [resolvable:$true] %s2365
          %2368 = dma.vmem_to_hbm [thread:$0]  %s2366, 2560, %s2363, %s2351
        $region48: #{tpu_custom_call.1} parent=31 // pred_fallthru
          _
      $region32: #{tpu_custom_call.1} parent=5 // pred_fallthru
        _
      %p2369 = scmp.le.s32.totalorder 2, %s16
      // Predicated region
      $region49: #{tpu_custom_call.1} parent=5 // pred_check
        %p2370 = pneg %p2369
      $region50: #{tpu_custom_call.1} parent=5 // pred_check_branch
        %2372 = sbr.rel (%p2370) target = $region52
      $region51: #{tpu_custom_call.1} parent=5 // pred_region
        %s2373 = ssub.s32 %s16, 2
        // Predicated region
        $region53: #{tpu_custom_call.1} parent=51 // pred_check
          %p2374 = pneg %p118
        $region54: #{tpu_custom_call.1} parent=51 // pred_check_branch
          %2376 = sbr.rel (%p2374) target = $region56
        $region55: #{tpu_custom_call.1} parent=51 // pred_region
          %s2377 = sand.u32 %s103, 1
          %s2378 = scalar_lea.sflag [#allocation4], %s2377
          %s2379 = sand.u32 %s103, 1
          %s2380 = smul.addr %s2379, 160
          %s2381 = scalar_lea.vmem [#allocation8], %s2380
          %2382 = dma.done %s2378, 2560
        $region56: #{tpu_custom_call.1} parent=51 // pred_fallthru
          _
      $region52: #{tpu_custom_call.1} parent=5 // pred_fallthru
        _
    $region6: #{tpu_custom_call.1} parent=1 // loop_footer
      %s20 = sadd.s32 1, %s16
    $region7: #{tpu_custom_call.1} parent=1 // loop_footer_branch
      %15 = sbr.rel target = $region3
    $region8: #{tpu_custom_call.1} parent=1 // loop_exit
      _
    %2383 = vsyncpa [#allocation3], 1
    %s2384 = scalar_lea.sflag [#allocation3], 1
    %2385 = vsyncpa %s2384, 1
    %2386 = vsyncpa [#allocation6], 1
    %s2387 = scalar_lea.sflag [#allocation6], 1
    %2388 = vsyncpa %s2387, 1
    %2389 = vsyncpa [#allocation4], 1
    %s2390 = scalar_lea.sflag [#allocation4], 1
    %2391 = vsyncpa %s2390, 1

</llo_original>
